<compile_context>
chip_gen: v6e
topology: v6e:2x2x1
jax: 0.10.0
libtpu: 0.0.40
codegen_flags: <defaults>
</compile_context>

<pallas_src>
import functools
import math

import jax
import jax.numpy as jnp
from jax.experimental import pallas as pl
from jax.experimental.pallas import tpu as pltpu


def _mha_kernel(q_ref, k_ref, v_ref,
                wq_ref, bq_ref, wk_ref, bk_ref, wv_ref, bv_ref,
                wo_ref, bo_ref, expand_ref,
                o_ref,
                qh_s, m_s, l_s, acc_s,
                *, num_heads, head_dim, skv, tkv, mask_kv):
    """One (batch, Sq-tile, KV-tile) grid step.

    q_ref: (Tq, Din)      k_ref/v_ref: (Tkv, Din)
    wq/wk/wv_ref: (Din, E)   bq/bk/bv_ref: (1, E)
    wo_ref: (E, E)   bo_ref: (1, E)   expand_ref: (H, E)   o_ref: (Tq, E)
    qh_s: (Tq, E) input dtype; m_s/l_s: (Tq, H) f32; acc_s: (Tq, E) f32.
    """
    kv = pl.program_id(2)
    n_kv = pl.num_programs(2)

    # Per-(batch, Sq-tile) init: Q projection for all heads (1/sqrt(Dh) already
    # folded into Wq/bq) and the online-softmax running stats.
    @pl.when(kv == 0)
    def _():
        qh = (jnp.dot(q_ref[...], wq_ref[...],
                      preferred_element_type=jnp.float32) + bq_ref[...])
        qh_s[...] = qh.astype(qh_s.dtype)
        m_s[...] = jnp.full_like(m_s, -jnp.inf)
        l_s[...] = jnp.zeros_like(l_s)
        acc_s[...] = jnp.zeros_like(acc_s)

    # K/V projections for ALL heads of this KV tile. Each K/V tile is streamed
    # from HBM once per (batch, Sq-tile) — never per head.
    kh = (jnp.dot(k_ref[...], wk_ref[...],
                  preferred_element_type=jnp.float32)
          + bk_ref[...]).astype(k_ref.dtype)                       # (Tkv, E)
    vh = (jnp.dot(v_ref[...], wv_ref[...],
                  preferred_element_type=jnp.float32)
          + bv_ref[...]).astype(v_ref.dtype)                       # (Tkv, E)

    qh = qh_s[...]                                                 # (Tq, E)
    tq = qh.shape[0]

    if mask_kv:
        col = jax.lax.broadcasted_iota(jnp.int32, (tq, tkv), 1)
        kv_valid = col < (skv - kv * tkv)

    # Unrolled static loop over heads; lane-slice the head-packed tensors.
    for h in range(num_heads):
        sl = slice(h * head_dim, (h + 1) * head_dim)
        # Logits: contract last dim vs last dim (trans_b form, no XLU transpose).
        s = jax.lax.dot_general(qh[:, sl], kh[:, sl],
                                (((1,), (1,)), ((), ())),
                                preferred_element_type=jnp.float32)  # (Tq, Tkv)
        if mask_kv:
            s = jnp.where(kv_valid, s, -1e30)

        m_old = m_s[:, h:h + 1]                                      # (Tq, 1)
        m_new = jnp.maximum(m_old, jnp.max(s, axis=-1, keepdims=True))
        alpha = jnp.exp(m_old - m_new)
        p = jnp.exp(s - m_new)                                       # (Tq, Tkv)
        l_s[:, h:h + 1] = alpha * l_s[:, h:h + 1] + jnp.sum(p, axis=-1,
                                                            keepdims=True)
        acc_s[:, sl] = alpha * acc_s[:, sl] + jnp.dot(
            p.astype(vh.dtype), vh[:, sl], preferred_element_type=jnp.float32)
        m_s[:, h:h + 1] = m_new

    # Last KV tile: one deferred normalization (EUP reciprocal + a tiny
    # (Tq,H)@(H,E) expansion matmul keeps it lane-dense) followed by a single
    # full-depth output projection and a lane-dense (Tq, E) store.
    @pl.when(kv == n_kv - 1)
    def _():
        inv = pl.reciprocal(l_s[...], approx=True)                   # (Tq, H)
        inv_full = jnp.dot(inv, expand_ref[...],
                           preferred_element_type=jnp.float32)       # (Tq, E)
        ctx = (acc_s[...] * inv_full).astype(wo_ref.dtype)
        out = jnp.dot(ctx, wo_ref[...],
                      preferred_element_type=jnp.float32) + bo_ref[...]
        o_ref[...] = out.astype(o_ref.dtype)


def _kv_tiling(skv):
    """Return (padded Skv, KV tile size).

    Pads Skv to a multiple of 128 (8 for very short sequences) so the tail is
    masked inside the kernel instead of processed as one unbounded tile.
    """
    if skv <= 128:
        t = skv + (-skv) % 8
        return t, t
    skv_pad = skv + (-skv) % 128
    for t in (512, 256, 128):   # TODO(synk): prefer 256 on v7x when Din is large.
        if skv_pad % t == 0:
            return skv_pad, t
    return skv_pad, 128


def _sq_tiling(sq):
    """Return (padded Sq, Sq tile size). Caps the resident f32 scratch."""
    if sq <= 256:
        t = sq + (-sq) % 8
        return t, t
    t = 256
    return sq + (-sq) % t, t


def _vmem_limit_bytes(tq, tkv, din, e, h, itemsize):
    """Rough double-buffered VMEM budget with headroom, capped for v7x (64 MiB)."""
    dbuf = 2
    blocks = dbuf * itemsize * (tq * din + 2 * tkv * din + 3 * din * e
                                + e * e + tq * e)
    blocks += dbuf * 4 * (4 * e + h * e)            # f32 biases + head-expand
    scratch = itemsize * tq * e + 4 * (tq * e + 2 * tq * h)
    est = blocks + scratch
    return int(min(64 * 1024 * 1024, max(32 * 1024 * 1024, 2 * est)))


def multihead_attention(q, k, v, params, num_heads):
    B, Sq, Din = q.shape
    _, Skv, _ = k.shape
    E = params["wq"].shape[0]
    assert E % num_heads == 0
    H = num_heads
    Dh = E // H
    scale = 1.0 / math.sqrt(Dh)
    cdt = q.dtype                       # MXU operand dtype follows the inputs

    sq_pad, Tq = _sq_tiling(Sq)
    n_sq = sq_pad // Tq
    skv_pad, Tkv = _kv_tiling(Skv)
    n_kv = skv_pad // Tkv
    mask_kv = skv_pad != Skv

    if sq_pad != Sq:
        q = jnp.pad(q, ((0, 0), (0, sq_pad - Sq), (0, 0)))
    if mask_kv:
        k = jnp.pad(k, ((0, 0), (0, skv_pad - Skv), (0, 0)))
        v = jnp.pad(v, ((0, 0), (0, skv_pad - Skv), (0, 0)))

    # One-time host-side layout / dtype transforms (free relative to the kernel).
    wq_t = (params["wq"].T * scale).astype(cdt)     # (Din, E), scale folded in
    wk_t = params["wk"].T.astype(cdt)               # (Din, E)
    wv_t = params["wv"].T.astype(cdt)               # (Din, E)
    wo_t = params["wo"].T.astype(cdt)               # (E, E)
    bq = (params["bq"] * scale).reshape(1, E).astype(jnp.float32)
    bk = params["bk"].reshape(1, E).astype(jnp.float32)
    bv = params["bv"].reshape(1, E).astype(jnp.float32)
    bo = params["bo"].reshape(1, E).astype(jnp.float32)
    # Block-indicator (H, E): expands (Tq, H) per-head reciprocals to (Tq, E).
    expand = jnp.repeat(jnp.eye(H, dtype=jnp.float32), Dh, axis=1)

    kernel = functools.partial(_mha_kernel, num_heads=H, head_dim=Dh,
                               skv=Skv, tkv=Tkv, mask_kv=mask_kv)

    in_specs = [
        pl.BlockSpec((None, Tq, Din), lambda b, s, kv: (b, s, 0)),    # q
        pl.BlockSpec((None, Tkv, Din), lambda b, s, kv: (b, kv, 0)),  # k
        pl.BlockSpec((None, Tkv, Din), lambda b, s, kv: (b, kv, 0)),  # v
        pl.BlockSpec((Din, E), lambda b, s, kv: (0, 0)),              # Wq^T * scale
        pl.BlockSpec((1, E), lambda b, s, kv: (0, 0)),                # bq * scale
        pl.BlockSpec((Din, E), lambda b, s, kv: (0, 0)),              # Wk^T
        pl.BlockSpec((1, E), lambda b, s, kv: (0, 0)),                # bk
        pl.BlockSpec((Din, E), lambda b, s, kv: (0, 0)),              # Wv^T
        pl.BlockSpec((1, E), lambda b, s, kv: (0, 0)),                # bv
        pl.BlockSpec((E, E), lambda b, s, kv: (0, 0)),                # Wo^T
        pl.BlockSpec((1, E), lambda b, s, kv: (0, 0)),                # bo
        pl.BlockSpec((H, E), lambda b, s, kv: (0, 0)),                # head expand
    ]
    out_specs = pl.BlockSpec((None, Tq, E), lambda b, s, kv: (b, s, 0))

    out = pl.pallas_call(
        kernel,
        out_shape=jax.ShapeDtypeStruct((B, sq_pad, E), cdt),
        grid_spec=pltpu.PrefetchScalarGridSpec(
            num_scalar_prefetch=0,
            grid=(B, n_sq, n_kv),
            in_specs=in_specs,
            out_specs=out_specs,
            scratch_shapes=[
                pltpu.VMEM((Tq, E), cdt),          # projected Q, all heads
                pltpu.VMEM((Tq, H), jnp.float32),  # running max per head
                pltpu.VMEM((Tq, H), jnp.float32),  # running sum per head
                pltpu.VMEM((Tq, E), jnp.float32),  # unnormalized context accum
            ],
        ),
        compiler_params=pltpu.CompilerParams(
            dimension_semantics=("parallel", "parallel", "arbitrary"),
            vmem_limit_bytes=_vmem_limit_bytes(Tq, Tkv, Din, E, H,
                                               jnp.dtype(cdt).itemsize)),
    )(q, k, v, wq_t, bq, wk_t, bk, wv_t, bv, wo_t, bo, expand)

    return out[:, :Sq, :] if sq_pad != Sq else out


def init_params(key, input_dim, embed_dim):
    """Deterministic init mirroring the PyTorch module:
    xavier_uniform_ weights, default nn.Linear bias init U(-1/sqrt(fan_in), 1/sqrt(fan_in))."""
    keys = jax.random.split(key, 8)

    def xavier(k, out_f, in_f):
        bound = math.sqrt(6.0 / (in_f + out_f))
        return jax.random.uniform(k, (out_f, in_f), jnp.float32, -bound, bound)

    def bias(k, out_f, in_f):
        bound = 1.0 / math.sqrt(in_f)
        return jax.random.uniform(k, (out_f,), jnp.float32, -bound, bound)

    return {
        "wq": xavier(keys[0], embed_dim, input_dim), "bq": bias(keys[1], embed_dim, input_dim),
        "wk": xavier(keys[2], embed_dim, input_dim), "bk": bias(keys[3], embed_dim, input_dim),
        "wv": xavier(keys[4], embed_dim, input_dim), "bv": bias(keys[5], embed_dim, input_dim),
        "wo": xavier(keys[6], embed_dim, embed_dim), "bo": bias(keys[7], embed_dim, embed_dim),
    }


def reference_mha(q, k, v, params, num_heads):
    """Pure-JAX reference reproducing the PyTorch forward (mask=None)."""
    B, Sq, _ = q.shape
    _, Skv, _ = k.shape
    E = params["wq"].shape[0]
    Dh = E // num_heads

    qe = q @ params["wq"].T + params["bq"]
    ke = k @ params["wk"].T + params["bk"]
    ve = v @ params["wv"].T + params["bv"]

    qh = qe.reshape(B, Sq, num_heads, Dh).transpose(0, 2, 1, 3)
    kh = ke.reshape(B, Skv, num_heads, Dh).transpose(0, 2, 1, 3)
    vh = ve.reshape(B, Skv, num_heads, Dh).transpose(0, 2, 1, 3)

    logits = jnp.einsum("bhqd,bhkd->bhqk", qh, kh) / math.sqrt(Dh)
    attn = jax.nn.softmax(logits, axis=-1)
    vals = jnp.einsum("bhqk,bhkd->bhqd", attn, vh)
    vals = vals.transpose(0, 2, 1, 3).reshape(B, Sq, E)
    return vals @ params["wo"].T + params["bo"]


if __name__ == "__main__":
    input_dim, embed_dim, num_heads = 16, 32, 4
    key = jax.random.PRNGKey(0)
    kp, kq, kk, kv_ = jax.random.split(key, 4)
    params = init_params(kp, input_dim, embed_dim)

    B, Sq = 2, 8
    q = jax.random.normal(kq, (B, Sq, input_dim), jnp.float32)

    # Tolerance: approx=True reciprocal in the final normalization (~1e-3 rel).
    ATOL = RTOL = 2e-3

    # Test 1: small square attention (single KV tile, no padding).
    Skv = 8
    k1 = jax.random.normal(kk, (B, Skv, input_dim), jnp.float32)
    v1 = jax.random.normal(kv_, (B, Skv, input_dim), jnp.float32)
    out1 = jax.block_until_ready(multihead_attention(q, k1, v1, params, num_heads))
    ref1 = reference_mha(q, k1, v1, params, num_heads)
    assert out1.shape == (B, Sq, embed_dim)
    assert jnp.allclose(out1, ref1, atol=ATOL, rtol=RTOL), "mismatch vs reference (test 1)"

    # Test 2: Skv=384 -> 3 KV tiles of 128 (online softmax across tiles).
    Skv2 = 384
    k2 = jax.random.normal(jax.random.PRNGKey(1), (B, Skv2, input_dim), jnp.float32)
    v2 = jax.random.normal(jax.random.PRNGKey(2), (B, Skv2, input_dim), jnp.float32)
    out2 = jax.block_until_ready(multihead_attention(q, k2, v2, params, num_heads))
    ref2 = reference_mha(q, k2, v2, params, num_heads)
    assert out2.shape == (B, Sq, embed_dim)
    assert jnp.allclose(out2, ref2, atol=ATOL, rtol=RTOL), "mismatch vs reference (test 2)"

    # Test 3: ragged Skv=200 -> padded to 256 (2 tiles), tail columns masked.
    Skv3 = 200
    k3 = jax.random.normal(jax.random.PRNGKey(3), (B, Skv3, input_dim), jnp.float32)
    v3 = jax.random.normal(jax.random.PRNGKey(4), (B, Skv3, input_dim), jnp.float32)
    out3 = jax.block_until_ready(multihead_attention(q, k3, v3, params, num_heads))
    ref3 = reference_mha(q, k3, v3, params, num_heads)
    assert out3.shape == (B, Sq, embed_dim)
    assert jnp.allclose(out3, ref3, atol=ATOL, rtol=RTOL), "mismatch vs reference (test 3)"

    print("KERNEL_OK")
</pallas_src>

<mosaic_0001>
module attributes {stable_mosaic.version = 11 : i64} {
  func.func @_mha_kernel(%arg0: i32, %arg1: i32, %arg2: i32, %arg3: memref<1x8x16xf32, #tpu.memory_space<vmem>>, %arg4: memref<1x8x16xf32, #tpu.memory_space<vmem>>, %arg5: memref<1x8x16xf32, #tpu.memory_space<vmem>>, %arg6: memref<16x32xf32, #tpu.memory_space<vmem>>, %arg7: memref<1x32xf32, #tpu.memory_space<vmem>>, %arg8: memref<16x32xf32, #tpu.memory_space<vmem>>, %arg9: memref<1x32xf32, #tpu.memory_space<vmem>>, %arg10: memref<16x32xf32, #tpu.memory_space<vmem>>, %arg11: memref<1x32xf32, #tpu.memory_space<vmem>>, %arg12: memref<32x32xf32, #tpu.memory_space<vmem>>, %arg13: memref<1x32xf32, #tpu.memory_space<vmem>>, %arg14: memref<4x32xf32, #tpu.memory_space<vmem>>, %arg15: memref<1x8x32xf32, #tpu.memory_space<vmem>>, %arg16: memref<8x32xf32, #tpu.memory_space<vmem>>, %arg17: memref<8x4xf32, #tpu.memory_space<vmem>>, %arg18: memref<8x4xf32, #tpu.memory_space<vmem>>, %arg19: memref<8x32xf32, #tpu.memory_space<vmem>>) attributes {dimension_semantics = [#tpu.dimension_semantics<parallel>, #tpu.dimension_semantics<parallel>, #tpu.dimension_semantics<arbitrary>], iteration_bounds = array<i64: 2, 1, 1>, scalar_prefetch = 0 : i64, scratch_operands = 4 : i64, tpu.core_type = #tpu.core_type<tc>, window_params = [{transform_indices = @transform_0, window_bounds = array<i64: 1, 8, 16>}, {transform_indices = @transform_1, window_bounds = array<i64: 1, 8, 16>}, {transform_indices = @transform_2, window_bounds = array<i64: 1, 8, 16>}, {pipeline_mode = #tpu.pipeline_mode<synchronous>, transform_indices = @transform_3, window_bounds = array<i64: 16, 32>}, {pipeline_mode = #tpu.pipeline_mode<synchronous>, transform_indices = @transform_4, window_bounds = array<i64: 1, 32>}, {pipeline_mode = #tpu.pipeline_mode<synchronous>, transform_indices = @transform_5, window_bounds = array<i64: 16, 32>}, {pipeline_mode = #tpu.pipeline_mode<synchronous>, transform_indices = @transform_6, window_bounds = array<i64: 1, 32>}, {pipeline_mode = #tpu.pipeline_mode<synchronous>, transform_indices = @transform_7, window_bounds = array<i64: 16, 32>}, {pipeline_mode = #tpu.pipeline_mode<synchronous>, transform_indices = @transform_8, window_bounds = array<i64: 1, 32>}, {pipeline_mode = #tpu.pipeline_mode<synchronous>, transform_indices = @transform_9, window_bounds = array<i64: 32, 32>}, {pipeline_mode = #tpu.pipeline_mode<synchronous>, transform_indices = @transform_10, window_bounds = array<i64: 1, 32>}, {pipeline_mode = #tpu.pipeline_mode<synchronous>, transform_indices = @transform_11, window_bounds = array<i64: 4, 32>}, {transform_indices = @transform_12, window_bounds = array<i64: 1, 8, 32>}]} {
    %c0_i32 = arith.constant 0 : i32
    %0 = arith.cmpi eq, %arg2, %c0_i32 : i32
    %1 = arith.extui %0 : i1 to i32
    %c0_i32_0 = arith.constant 0 : i32
    %2 = arith.cmpi ne, %1, %c0_i32_0 : i32
    scf.if %2 {
      %c0_77 = arith.constant 0 : index
      %c0_78 = arith.constant 0 : index
      %c0_79 = arith.constant 0 : index
      %125 = vector.load %arg3[%c0_77, %c0_78, %c0_79] : memref<1x8x16xf32, #tpu.memory_space<vmem>>, vector<1x8x16xf32>
      %126 = vector.shape_cast %125 : vector<1x8x16xf32> to vector<8x16xf32>
      %c0_80 = arith.constant 0 : index
      %c0_81 = arith.constant 0 : index
      %127 = vector.load %arg6[%c0_80, %c0_81] : memref<16x32xf32, #tpu.memory_space<vmem>>, vector<16x32xf32>
      %cst_82 = arith.constant dense<0.000000e+00> : vector<8x32xf32>
      %128 = tpu.matmul %126, %127, %cst_82 {dimension_numbers = #tpu.dot_dimension_numbers<[1], [0], [0], [1], [0, 0, 1, 1], [], []>} : vector<8x16xf32>, vector<16x32xf32>, vector<8x32xf32> -> vector<8x32xf32>
      %c0_83 = arith.constant 0 : index
      %c0_84 = arith.constant 0 : index
      %129 = vector.load %arg7[%c0_83, %c0_84] : memref<1x32xf32, #tpu.memory_space<vmem>>, vector<1x32xf32>
      %130 = vector.broadcast %129 : vector<1x32xf32> to vector<8x32xf32>
      %131 = arith.addf %128, %130 : vector<8x32xf32>
      %c0_85 = arith.constant 0 : index
      %c0_86 = arith.constant 0 : index
      %132 = vector.load %arg16[%c0_85, %c0_86] : memref<8x32xf32, #tpu.memory_space<vmem>>, vector<8x32xf32>
      tpu.vector_store %arg16[%c0_85, %c0_86], %131 {strides = array<i32>} : memref<8x32xf32, #tpu.memory_space<vmem>>, vector<8x32xf32>,
      %cst_87 = arith.constant 0xFF800000 : f32
      %133 = vector.broadcast %cst_87 : f32 to vector<8x4xf32>
      %c0_88 = arith.constant 0 : index
      %c0_89 = arith.constant 0 : index
      %134 = vector.load %arg17[%c0_88, %c0_89] : memref<8x4xf32, #tpu.memory_space<vmem>>, vector<8x4xf32>
      tpu.vector_store %arg17[%c0_88, %c0_89], %133 {strides = array<i32>} : memref<8x4xf32, #tpu.memory_space<vmem>>, vector<8x4xf32>,
      %cst_90 = arith.constant 0.000000e+00 : f32
      %135 = vector.broadcast %cst_90 : f32 to vector<8x4xf32>
      %c0_91 = arith.constant 0 : index
      %c0_92 = arith.constant 0 : index
      %136 = vector.load %arg18[%c0_91, %c0_92] : memref<8x4xf32, #tpu.memory_space<vmem>>, vector<8x4xf32>
      tpu.vector_store %arg18[%c0_91, %c0_92], %135 {strides = array<i32>} : memref<8x4xf32, #tpu.memory_space<vmem>>, vector<8x4xf32>,
      %cst_93 = arith.constant 0.000000e+00 : f32
      %137 = vector.broadcast %cst_93 : f32 to vector<8x32xf32>
      %c0_94 = arith.constant 0 : index
      %c0_95 = arith.constant 0 : index
      %138 = vector.load %arg19[%c0_94, %c0_95] : memref<8x32xf32, #tpu.memory_space<vmem>>, vector<8x32xf32>
      tpu.vector_store %arg19[%c0_94, %c0_95], %137 {strides = array<i32>} : memref<8x32xf32, #tpu.memory_space<vmem>>, vector<8x32xf32>,
    } else {
    }
    %c0 = arith.constant 0 : index
    %c0_1 = arith.constant 0 : index
    %c0_2 = arith.constant 0 : index
    %3 = vector.load %arg4[%c0, %c0_1, %c0_2] : memref<1x8x16xf32, #tpu.memory_space<vmem>>, vector<1x8x16xf32>
    %4 = vector.shape_cast %3 : vector<1x8x16xf32> to vector<8x16xf32>
    %c0_3 = arith.constant 0 : index
    %c0_4 = arith.constant 0 : index
    %5 = vector.load %arg8[%c0_3, %c0_4] : memref<16x32xf32, #tpu.memory_space<vmem>>, vector<16x32xf32>
    %cst = arith.constant dense<0.000000e+00> : vector<8x32xf32>
    %6 = tpu.matmul %4, %5, %cst {dimension_numbers = #tpu.dot_dimension_numbers<[1], [0], [0], [1], [0, 0, 1, 1], [], []>} : vector<8x16xf32>, vector<16x32xf32>, vector<8x32xf32> -> vector<8x32xf32>
    %c0_5 = arith.constant 0 : index
    %c0_6 = arith.constant 0 : index
    %7 = vector.load %arg9[%c0_5, %c0_6] : memref<1x32xf32, #tpu.memory_space<vmem>>, vector<1x32xf32>
    %8 = vector.broadcast %7 : vector<1x32xf32> to vector<8x32xf32>
    %9 = arith.addf %6, %8 : vector<8x32xf32>
    %c0_7 = arith.constant 0 : index
    %c0_8 = arith.constant 0 : index
    %c0_9 = arith.constant 0 : index
    %10 = vector.load %arg5[%c0_7, %c0_8, %c0_9] : memref<1x8x16xf32, #tpu.memory_space<vmem>>, vector<1x8x16xf32>
    %11 = vector.shape_cast %10 : vector<1x8x16xf32> to vector<8x16xf32>
    %c0_10 = arith.constant 0 : index
    %c0_11 = arith.constant 0 : index
    %12 = vector.load %arg10[%c0_10, %c0_11] : memref<16x32xf32, #tpu.memory_space<vmem>>, vector<16x32xf32>
    %cst_12 = arith.constant dense<0.000000e+00> : vector<8x32xf32>
    %13 = tpu.matmul %11, %12, %cst_12 {dimension_numbers = #tpu.dot_dimension_numbers<[1], [0], [0], [1], [0, 0, 1, 1], [], []>} : vector<8x16xf32>, vector<16x32xf32>, vector<8x32xf32> -> vector<8x32xf32>
    %c0_13 = arith.constant 0 : index
    %c0_14 = arith.constant 0 : index
    %14 = vector.load %arg11[%c0_13, %c0_14] : memref<1x32xf32, #tpu.memory_space<vmem>>, vector<1x32xf32>
    %15 = vector.broadcast %14 : vector<1x32xf32> to vector<8x32xf32>
    %16 = arith.addf %13, %15 : vector<8x32xf32>
    %c0_15 = arith.constant 0 : index
    %c0_16 = arith.constant 0 : index
    %17 = vector.load %arg16[%c0_15, %c0_16] : memref<8x32xf32, #tpu.memory_space<vmem>>, vector<8x32xf32>
    %18 = vector.extract_strided_slice %17 {offsets = [0, 0], sizes = [8, 8], strides = [1, 1]} : vector<8x32xf32> to vector<8x8xf32>
    %19 = vector.extract_strided_slice %9 {offsets = [0, 0], sizes = [8, 8], strides = [1, 1]} : vector<8x32xf32> to vector<8x8xf32>
    %cst_17 = arith.constant dense<0.000000e+00> : vector<8x8xf32>
    %20 = tpu.matmul %18, %19, %cst_17 {dimension_numbers = #tpu.dot_dimension_numbers<[1], [1], [0], [0], [0, 0, 1, 0], [], []>} : vector<8x8xf32>, vector<8x8xf32>, vector<8x8xf32> -> vector<8x8xf32>
    %c0_18 = arith.constant 0 : index
    %c0_19 = arith.constant 0 : index
    %21 = vector.load %arg17[%c0_18, %c0_19] : memref<8x4xf32, #tpu.memory_space<vmem>>, vector<8x1xf32>
    %cst_20 = arith.constant dense<0xFF800000> : vector<8xf32>
    %22 = vector.multi_reduction <maximumf>, %20, %cst_20 [1] : vector<8x8xf32> to vector<8xf32>
    %23 = vector.shape_cast %22 : vector<8xf32> to vector<8x1xf32>
    %24 = arith.maximumf %21, %23 : vector<8x1xf32>
    %25 = arith.subf %21, %24 : vector<8x1xf32>
    %26 = math.exp %25 : vector<8x1xf32>
    %27 = vector.broadcast %24 : vector<8x1xf32> to vector<8x8xf32>
    %28 = arith.subf %20, %27 : vector<8x8xf32>
    %29 = math.exp %28 : vector<8x8xf32>
    %c0_21 = arith.constant 0 : index
    %c0_22 = arith.constant 0 : index
    %30 = vector.load %arg18[%c0_21, %c0_22] : memref<8x4xf32, #tpu.memory_space<vmem>>, vector<8x1xf32>
    %31 = arith.mulf %26, %30 : vector<8x1xf32>
    %cst_23 = arith.constant dense<0.000000e+00> : vector<8xf32>
    %32 = vector.multi_reduction <add>, %29, %cst_23 [1] : vector<8x8xf32> to vector<8xf32>
    %33 = vector.shape_cast %32 : vector<8xf32> to vector<8x1xf32>
    %34 = arith.addf %31, %33 : vector<8x1xf32>
    %c0_24 = arith.constant 0 : index
    %c0_25 = arith.constant 0 : index
    %35 = vector.load %arg18[%c0_24, %c0_25] : memref<8x4xf32, #tpu.memory_space<vmem>>, vector<8x1xf32>
    tpu.vector_store %arg18[%c0_24, %c0_25], %34 {strides = array<i32>} : memref<8x4xf32, #tpu.memory_space<vmem>>, vector<8x1xf32>,
    %c0_26 = arith.constant 0 : index
    %c0_27 = arith.constant 0 : index
    %36 = vector.load %arg19[%c0_26, %c0_27] : memref<8x32xf32, #tpu.memory_space<vmem>>, vector<8x8xf32>
    %37 = vector.broadcast %26 : vector<8x1xf32> to vector<8x8xf32>
    %38 = arith.mulf %37, %36 : vector<8x8xf32>
    %39 = vector.extract_strided_slice %16 {offsets = [0, 0], sizes = [8, 8], strides = [1, 1]} : vector<8x32xf32> to vector<8x8xf32>
    %cst_28 = arith.constant dense<0.000000e+00> : vector<8x8xf32>
    %40 = tpu.matmul %29, %39, %cst_28 {dimension_numbers = #tpu.dot_dimension_numbers<[1], [0], [0], [1], [0, 0, 1, 1], [], []>} : vector<8x8xf32>, vector<8x8xf32>, vector<8x8xf32> -> vector<8x8xf32>
    %41 = arith.addf %38, %40 : vector<8x8xf32>
    %c0_29 = arith.constant 0 : index
    %c0_30 = arith.constant 0 : index
    %42 = vector.load %arg19[%c0_29, %c0_30] : memref<8x32xf32, #tpu.memory_space<vmem>>, vector<8x8xf32>
    tpu.vector_store %arg19[%c0_29, %c0_30], %41 {strides = array<i32>} : memref<8x32xf32, #tpu.memory_space<vmem>>, vector<8x8xf32>,
    %c0_31 = arith.constant 0 : index
    %c0_32 = arith.constant 0 : index
    %43 = vector.load %arg17[%c0_31, %c0_32] : memref<8x4xf32, #tpu.memory_space<vmem>>, vector<8x1xf32>
    tpu.vector_store %arg17[%c0_31, %c0_32], %24 {strides = array<i32>} : memref<8x4xf32, #tpu.memory_space<vmem>>, vector<8x1xf32>,
    %44 = vector.extract_strided_slice %17 {offsets = [0, 8], sizes = [8, 8], strides = [1, 1]} : vector<8x32xf32> to vector<8x8xf32>
    %45 = vector.extract_strided_slice %9 {offsets = [0, 8], sizes = [8, 8], strides = [1, 1]} : vector<8x32xf32> to vector<8x8xf32>
    %cst_33 = arith.constant dense<0.000000e+00> : vector<8x8xf32>
    %46 = tpu.matmul %44, %45, %cst_33 {dimension_numbers = #tpu.dot_dimension_numbers<[1], [1], [0], [0], [0, 0, 1, 0], [], []>} : vector<8x8xf32>, vector<8x8xf32>, vector<8x8xf32> -> vector<8x8xf32>
    %c0_34 = arith.constant 0 : index
    %c1 = arith.constant 1 : index
    %47 = vector.load %arg17[%c0_34, %c1] : memref<8x4xf32, #tpu.memory_space<vmem>>, vector<8x1xf32>
    %cst_35 = arith.constant dense<0xFF800000> : vector<8xf32>
    %48 = vector.multi_reduction <maximumf>, %46, %cst_35 [1] : vector<8x8xf32> to vector<8xf32>
    %49 = vector.shape_cast %48 : vector<8xf32> to vector<8x1xf32>
    %50 = arith.maximumf %47, %49 : vector<8x1xf32>
    %51 = arith.subf %47, %50 : vector<8x1xf32>
    %52 = math.exp %51 : vector<8x1xf32>
    %53 = vector.broadcast %50 : vector<8x1xf32> to vector<8x8xf32>
    %54 = arith.subf %46, %53 : vector<8x8xf32>
    %55 = math.exp %54 : vector<8x8xf32>
    %c0_36 = arith.constant 0 : index
    %c1_37 = arith.constant 1 : index
    %56 = vector.load %arg18[%c0_36, %c1_37] : memref<8x4xf32, #tpu.memory_space<vmem>>, vector<8x1xf32>
    %57 = arith.mulf %52, %56 : vector<8x1xf32>
    %cst_38 = arith.constant dense<0.000000e+00> : vector<8xf32>
    %58 = vector.multi_reduction <add>, %55, %cst_38 [1] : vector<8x8xf32> to vector<8xf32>
    %59 = vector.shape_cast %58 : vector<8xf32> to vector<8x1xf32>
    %60 = arith.addf %57, %59 : vector<8x1xf32>
    %c0_39 = arith.constant 0 : index
    %c1_40 = arith.constant 1 : index
    %61 = vector.load %arg18[%c0_39, %c1_40] : memref<8x4xf32, #tpu.memory_space<vmem>>, vector<8x1xf32>
    tpu.vector_store %arg18[%c0_39, %c1_40], %60 {strides = array<i32>} : memref<8x4xf32, #tpu.memory_space<vmem>>, vector<8x1xf32>,
    %c0_41 = arith.constant 0 : index
    %c8 = arith.constant 8 : index
    %62 = vector.load %arg19[%c0_41, %c8] : memref<8x32xf32, #tpu.memory_space<vmem>>, vector<8x8xf32>
    %63 = vector.broadcast %52 : vector<8x1xf32> to vector<8x8xf32>
    %64 = arith.mulf %63, %62 : vector<8x8xf32>
    %65 = vector.extract_strided_slice %16 {offsets = [0, 8], sizes = [8, 8], strides = [1, 1]} : vector<8x32xf32> to vector<8x8xf32>
    %cst_42 = arith.constant dense<0.000000e+00> : vector<8x8xf32>
    %66 = tpu.matmul %55, %65, %cst_42 {dimension_numbers = #tpu.dot_dimension_numbers<[1], [0], [0], [1], [0, 0, 1, 1], [], []>} : vector<8x8xf32>, vector<8x8xf32>, vector<8x8xf32> -> vector<8x8xf32>
    %67 = arith.addf %64, %66 : vector<8x8xf32>
    %c0_43 = arith.constant 0 : index
    %c8_44 = arith.constant 8 : index
    %68 = vector.load %arg19[%c0_43, %c8_44] : memref<8x32xf32, #tpu.memory_space<vmem>>, vector<8x8xf32>
    tpu.vector_store %arg19[%c0_43, %c8_44], %67 {strides = array<i32>} : memref<8x32xf32, #tpu.memory_space<vmem>>, vector<8x8xf32>,
    %c0_45 = arith.constant 0 : index
    %c1_46 = arith.constant 1 : index
    %69 = vector.load %arg17[%c0_45, %c1_46] : memref<8x4xf32, #tpu.memory_space<vmem>>, vector<8x1xf32>
    tpu.vector_store %arg17[%c0_45, %c1_46], %50 {strides = array<i32>} : memref<8x4xf32, #tpu.memory_space<vmem>>, vector<8x1xf32>,
    %70 = vector.extract_strided_slice %17 {offsets = [0, 16], sizes = [8, 8], strides = [1, 1]} : vector<8x32xf32> to vector<8x8xf32>
    %71 = vector.extract_strided_slice %9 {offsets = [0, 16], sizes = [8, 8], strides = [1, 1]} : vector<8x32xf32> to vector<8x8xf32>
    %cst_47 = arith.constant dense<0.000000e+00> : vector<8x8xf32>
    %72 = tpu.matmul %70, %71, %cst_47 {dimension_numbers = #tpu.dot_dimension_numbers<[1], [1], [0], [0], [0, 0, 1, 0], [], []>} : vector<8x8xf32>, vector<8x8xf32>, vector<8x8xf32> -> vector<8x8xf32>
    %c0_48 = arith.constant 0 : index
    %c2 = arith.constant 2 : index
    %73 = vector.load %arg17[%c0_48, %c2] : memref<8x4xf32, #tpu.memory_space<vmem>>, vector<8x1xf32>
    %cst_49 = arith.constant dense<0xFF800000> : vector<8xf32>
    %74 = vector.multi_reduction <maximumf>, %72, %cst_49 [1] : vector<8x8xf32> to vector<8xf32>
    %75 = vector.shape_cast %74 : vector<8xf32> to vector<8x1xf32>
    %76 = arith.maximumf %73, %75 : vector<8x1xf32>
    %77 = arith.subf %73, %76 : vector<8x1xf32>
    %78 = math.exp %77 : vector<8x1xf32>
    %79 = vector.broadcast %76 : vector<8x1xf32> to vector<8x8xf32>
    %80 = arith.subf %72, %79 : vector<8x8xf32>
    %81 = math.exp %80 : vector<8x8xf32>
    %c0_50 = arith.constant 0 : index
    %c2_51 = arith.constant 2 : index
    %82 = vector.load %arg18[%c0_50, %c2_51] : memref<8x4xf32, #tpu.memory_space<vmem>>, vector<8x1xf32>
    %83 = arith.mulf %78, %82 : vector<8x1xf32>
    %cst_52 = arith.constant dense<0.000000e+00> : vector<8xf32>
    %84 = vector.multi_reduction <add>, %81, %cst_52 [1] : vector<8x8xf32> to vector<8xf32>
    %85 = vector.shape_cast %84 : vector<8xf32> to vector<8x1xf32>
    %86 = arith.addf %83, %85 : vector<8x1xf32>
    %c0_53 = arith.constant 0 : index
    %c2_54 = arith.constant 2 : index
    %87 = vector.load %arg18[%c0_53, %c2_54] : memref<8x4xf32, #tpu.memory_space<vmem>>, vector<8x1xf32>
    tpu.vector_store %arg18[%c0_53, %c2_54], %86 {strides = array<i32>} : memref<8x4xf32, #tpu.memory_space<vmem>>, vector<8x1xf32>,
    %c0_55 = arith.constant 0 : index
    %c16 = arith.constant 16 : index
    %88 = vector.load %arg19[%c0_55, %c16] : memref<8x32xf32, #tpu.memory_space<vmem>>, vector<8x8xf32>
    %89 = vector.broadcast %78 : vector<8x1xf32> to vector<8x8xf32>
    %90 = arith.mulf %89, %88 : vector<8x8xf32>
    %91 = vector.extract_strided_slice %16 {offsets = [0, 16], sizes = [8, 8], strides = [1, 1]} : vector<8x32xf32> to vector<8x8xf32>
    %cst_56 = arith.constant dense<0.000000e+00> : vector<8x8xf32>
    %92 = tpu.matmul %81, %91, %cst_56 {dimension_numbers = #tpu.dot_dimension_numbers<[1], [0], [0], [1], [0, 0, 1, 1], [], []>} : vector<8x8xf32>, vector<8x8xf32>, vector<8x8xf32> -> vector<8x8xf32>
    %93 = arith.addf %90, %92 : vector<8x8xf32>
    %c0_57 = arith.constant 0 : index
    %c16_58 = arith.constant 16 : index
    %94 = vector.load %arg19[%c0_57, %c16_58] : memref<8x32xf32, #tpu.memory_space<vmem>>, vector<8x8xf32>
    tpu.vector_store %arg19[%c0_57, %c16_58], %93 {strides = array<i32>} : memref<8x32xf32, #tpu.memory_space<vmem>>, vector<8x8xf32>,
    %c0_59 = arith.constant 0 : index
    %c2_60 = arith.constant 2 : index
    %95 = vector.load %arg17[%c0_59, %c2_60] : memref<8x4xf32, #tpu.memory_space<vmem>>, vector<8x1xf32>
    tpu.vector_store %arg17[%c0_59, %c2_60], %76 {strides = array<i32>} : memref<8x4xf32, #tpu.memory_space<vmem>>, vector<8x1xf32>,
    %96 = vector.extract_strided_slice %17 {offsets = [0, 24], sizes = [8, 8], strides = [1, 1]} : vector<8x32xf32> to vector<8x8xf32>
    %97 = vector.extract_strided_slice %9 {offsets = [0, 24], sizes = [8, 8], strides = [1, 1]} : vector<8x32xf32> to vector<8x8xf32>
    %cst_61 = arith.constant dense<0.000000e+00> : vector<8x8xf32>
    %98 = tpu.matmul %96, %97, %cst_61 {dimension_numbers = #tpu.dot_dimension_numbers<[1], [1], [0], [0], [0, 0, 1, 0], [], []>} : vector<8x8xf32>, vector<8x8xf32>, vector<8x8xf32> -> vector<8x8xf32>
    %c0_62 = arith.constant 0 : index
    %c3 = arith.constant 3 : index
    %99 = vector.load %arg17[%c0_62, %c3] : memref<8x4xf32, #tpu.memory_space<vmem>>, vector<8x1xf32>
    %cst_63 = arith.constant dense<0xFF800000> : vector<8xf32>
    %100 = vector.multi_reduction <maximumf>, %98, %cst_63 [1] : vector<8x8xf32> to vector<8xf32>
    %101 = vector.shape_cast %100 : vector<8xf32> to vector<8x1xf32>
    %102 = arith.maximumf %99, %101 : vector<8x1xf32>
    %103 = arith.subf %99, %102 : vector<8x1xf32>
    %104 = math.exp %103 : vector<8x1xf32>
    %105 = vector.broadcast %102 : vector<8x1xf32> to vector<8x8xf32>
    %106 = arith.subf %98, %105 : vector<8x8xf32>
    %107 = math.exp %106 : vector<8x8xf32>
    %c0_64 = arith.constant 0 : index
    %c3_65 = arith.constant 3 : index
    %108 = vector.load %arg18[%c0_64, %c3_65] : memref<8x4xf32, #tpu.memory_space<vmem>>, vector<8x1xf32>
    %109 = arith.mulf %104, %108 : vector<8x1xf32>
    %cst_66 = arith.constant dense<0.000000e+00> : vector<8xf32>
    %110 = vector.multi_reduction <add>, %107, %cst_66 [1] : vector<8x8xf32> to vector<8xf32>
    %111 = vector.shape_cast %110 : vector<8xf32> to vector<8x1xf32>
    %112 = arith.addf %109, %111 : vector<8x1xf32>
    %c0_67 = arith.constant 0 : index
    %c3_68 = arith.constant 3 : index
    %113 = vector.load %arg18[%c0_67, %c3_68] : memref<8x4xf32, #tpu.memory_space<vmem>>, vector<8x1xf32>
    tpu.vector_store %arg18[%c0_67, %c3_68], %112 {strides = array<i32>} : memref<8x4xf32, #tpu.memory_space<vmem>>, vector<8x1xf32>,
    %c0_69 = arith.constant 0 : index
    %c24 = arith.constant 24 : index
    %114 = vector.load %arg19[%c0_69, %c24] : memref<8x32xf32, #tpu.memory_space<vmem>>, vector<8x8xf32>
    %115 = vector.broadcast %104 : vector<8x1xf32> to vector<8x8xf32>
    %116 = arith.mulf %115, %114 : vector<8x8xf32>
    %117 = vector.extract_strided_slice %16 {offsets = [0, 24], sizes = [8, 8], strides = [1, 1]} : vector<8x32xf32> to vector<8x8xf32>
    %cst_70 = arith.constant dense<0.000000e+00> : vector<8x8xf32>
    %118 = tpu.matmul %107, %117, %cst_70 {dimension_numbers = #tpu.dot_dimension_numbers<[1], [0], [0], [1], [0, 0, 1, 1], [], []>} : vector<8x8xf32>, vector<8x8xf32>, vector<8x8xf32> -> vector<8x8xf32>
    %119 = arith.addf %116, %118 : vector<8x8xf32>
    %c0_71 = arith.constant 0 : index
    %c24_72 = arith.constant 24 : index
    %120 = vector.load %arg19[%c0_71, %c24_72] : memref<8x32xf32, #tpu.memory_space<vmem>>, vector<8x8xf32>
    tpu.vector_store %arg19[%c0_71, %c24_72], %119 {strides = array<i32>} : memref<8x32xf32, #tpu.memory_space<vmem>>, vector<8x8xf32>,
    %c0_73 = arith.constant 0 : index
    %c3_74 = arith.constant 3 : index
    %121 = vector.load %arg17[%c0_73, %c3_74] : memref<8x4xf32, #tpu.memory_space<vmem>>, vector<8x1xf32>
    tpu.vector_store %arg17[%c0_73, %c3_74], %102 {strides = array<i32>} : memref<8x4xf32, #tpu.memory_space<vmem>>, vector<8x1xf32>,
    %c0_i32_75 = arith.constant 0 : i32
    %122 = arith.cmpi eq, %arg2, %c0_i32_75 : i32
    %123 = arith.extui %122 : i1 to i32
    %c0_i32_76 = arith.constant 0 : i32
    %124 = arith.cmpi ne, %123, %c0_i32_76 : i32
    scf.if %124 {
      %c0_77 = arith.constant 0 : index
      %c0_78 = arith.constant 0 : index
      %125 = vector.load %arg18[%c0_77, %c0_78] : memref<8x4xf32, #tpu.memory_space<vmem>>, vector<8x4xf32>
      %126 = tpu.reciprocal %125 {approx = true} : vector<8x4xf32> -> vector<8x4xf32>
      %c0_79 = arith.constant 0 : index
      %c0_80 = arith.constant 0 : index
      %127 = vector.load %arg14[%c0_79, %c0_80] : memref<4x32xf32, #tpu.memory_space<vmem>>, vector<4x32xf32>
      %cst_81 = arith.constant dense<0.000000e+00> : vector<8x32xf32>
      %128 = tpu.matmul %126, %127, %cst_81 {dimension_numbers = #tpu.dot_dimension_numbers<[1], [0], [0], [1], [0, 0, 1, 1], [], []>} : vector<8x4xf32>, vector<4x32xf32>, vector<8x32xf32> -> vector<8x32xf32>
      %c0_82 = arith.constant 0 : index
      %c0_83 = arith.constant 0 : index
      %129 = vector.load %arg19[%c0_82, %c0_83] : memref<8x32xf32, #tpu.memory_space<vmem>>, vector<8x32xf32>
      %130 = arith.mulf %129, %128 : vector<8x32xf32>
      %c0_84 = arith.constant 0 : index
      %c0_85 = arith.constant 0 : index
      %131 = vector.load %arg12[%c0_84, %c0_85] : memref<32x32xf32, #tpu.memory_space<vmem>>, vector<32x32xf32>
      %cst_86 = arith.constant dense<0.000000e+00> : vector<8x32xf32>
      %132 = tpu.matmul %130, %131, %cst_86 {dimension_numbers = #tpu.dot_dimension_numbers<[1], [0], [0], [1], [0, 0, 1, 1], [], []>} : vector<8x32xf32>, vector<32x32xf32>, vector<8x32xf32> -> vector<8x32xf32>
      %c0_87 = arith.constant 0 : index
      %c0_88 = arith.constant 0 : index
      %133 = vector.load %arg13[%c0_87, %c0_88] : memref<1x32xf32, #tpu.memory_space<vmem>>, vector<1x32xf32>
      %134 = vector.broadcast %133 : vector<1x32xf32> to vector<8x32xf32>
      %135 = arith.addf %132, %134 : vector<8x32xf32>
      %c0_89 = arith.constant 0 : index
      %c0_90 = arith.constant 0 : index
      %c0_91 = arith.constant 0 : index
      %136 = vector.load %arg15[%c0_89, %c0_90, %c0_91] : memref<1x8x32xf32, #tpu.memory_space<vmem>>, vector<1x8x32xf32>
      %137 = vector.shape_cast %136 : vector<1x8x32xf32> to vector<8x32xf32>
      %138 = vector.shape_cast %135 : vector<8x32xf32> to vector<1x8x32xf32>
      tpu.vector_store %arg15[%c0_89, %c0_90, %c0_91], %138 {strides = array<i32>} : memref<1x8x32xf32, #tpu.memory_space<vmem>>, vector<1x8x32xf32>,
    } else {
    }
    return
  }
  func.func @transform_0(%arg0: i32, %arg1: i32, %arg2: i32) -> (i32, i32, i32) {
    %c0_i32 = arith.constant 0 : i32
    %c0_i32_0 = arith.constant 0 : i32
    return %arg0, %arg1, %c0_i32 : i32, i32, i32
  }
  func.func @transform_1(%arg0: i32, %arg1: i32, %arg2: i32) -> (i32, i32, i32) {
    %c0_i32 = arith.constant 0 : i32
    %c0_i32_0 = arith.constant 0 : i32
    return %arg0, %arg2, %c0_i32 : i32, i32, i32
  }
  func.func @transform_2(%arg0: i32, %arg1: i32, %arg2: i32) -> (i32, i32, i32) {
    %c0_i32 = arith.constant 0 : i32
    %c0_i32_0 = arith.constant 0 : i32
    return %arg0, %arg2, %c0_i32 : i32, i32, i32
  }
  func.func @transform_3(%arg0: i32, %arg1: i32, %arg2: i32) -> (i32, i32) {
    %c0_i32 = arith.constant 0 : i32
    %c0_i32_0 = arith.constant 0 : i32
    %c0_i32_1 = arith.constant 0 : i32
    return %c0_i32, %c0_i32_0 : i32, i32
  }
  func.func @transform_4(%arg0: i32, %arg1: i32, %arg2: i32) -> (i32, i32) {
    %c0_i32 = arith.constant 0 : i32
    %c0_i32_0 = arith.constant 0 : i32
    %c0_i32_1 = arith.constant 0 : i32
    return %c0_i32, %c0_i32_0 : i32, i32
  }
  func.func @transform_5(%arg0: i32, %arg1: i32, %arg2: i32) -> (i32, i32) {
    %c0_i32 = arith.constant 0 : i32
    %c0_i32_0 = arith.constant 0 : i32
    %c0_i32_1 = arith.constant 0 : i32
    return %c0_i32, %c0_i32_0 : i32, i32
  }
  func.func @transform_6(%arg0: i32, %arg1: i32, %arg2: i32) -> (i32, i32) {
    %c0_i32 = arith.constant 0 : i32
    %c0_i32_0 = arith.constant 0 : i32
    %c0_i32_1 = arith.constant 0 : i32
    return %c0_i32, %c0_i32_0 : i32, i32
  }
  func.func @transform_7(%arg0: i32, %arg1: i32, %arg2: i32) -> (i32, i32) {
    %c0_i32 = arith.constant 0 : i32
    %c0_i32_0 = arith.constant 0 : i32
    %c0_i32_1 = arith.constant 0 : i32
    return %c0_i32, %c0_i32_0 : i32, i32
  }
  func.func @transform_8(%arg0: i32, %arg1: i32, %arg2: i32) -> (i32, i32) {
    %c0_i32 = arith.constant 0 : i32
    %c0_i32_0 = arith.constant 0 : i32
    %c0_i32_1 = arith.constant 0 : i32
    return %c0_i32, %c0_i32_0 : i32, i32
  }
  func.func @transform_9(%arg0: i32, %arg1: i32, %arg2: i32) -> (i32, i32) {
    %c0_i32 = arith.constant 0 : i32
    %c0_i32_0 = arith.constant 0 : i32
    %c0_i32_1 = arith.constant 0 : i32
    return %c0_i32, %c0_i32_0 : i32, i32
  }
  func.func @transform_10(%arg0: i32, %arg1: i32, %arg2: i32) -> (i32, i32) {
    %c0_i32 = arith.constant 0 : i32
    %c0_i32_0 = arith.constant 0 : i32
    %c0_i32_1 = arith.constant 0 : i32
    return %c0_i32, %c0_i32_0 : i32, i32
  }
  func.func @transform_11(%arg0: i32, %arg1: i32, %arg2: i32) -> (i32, i32) {
    %c0_i32 = arith.constant 0 : i32
    %c0_i32_0 = arith.constant 0 : i32
    %c0_i32_1 = arith.constant 0 : i32
    return %c0_i32, %c0_i32_0 : i32, i32
  }
  func.func @transform_12(%arg0: i32, %arg1: i32, %arg2: i32) -> (i32, i32, i32) {
    %c0_i32 = arith.constant 0 : i32
    %c0_i32_0 = arith.constant 0 : i32
    return %arg0, %arg1, %c0_i32 : i32, i32, i32
  }
}

</mosaic_0001>

<llo_original>
// kernel: tpu_custom_call.1
$region0: #{tpu_custom_call.1}
  #allocation0 [shape = 'u32[]', space=smem, size = 0x4, offset = 0x4, fixed_abs, tag = 'smem constant byte address 0x4 - core index']
  #allocation1 [shape = 'u32[144,128]{1,0:T(1,128)}', space=vmem, size = 0x12000, scoped, tag = 'internal scratch']
  #allocation2 [shape = 'f32[8,32]{1,0:T(8,128)}', space=vmem, size = 0x1000, scoped, tag = 'scratch operand']
  #allocation3 [shape = 'f32[8,4]{1,0:T(8,128)}', space=vmem, size = 0x1000, scoped, tag = 'scratch operand']
  #allocation4 [shape = 'f32[8,4]{1,0:T(8,128)}', space=vmem, size = 0x1000, scoped, tag = 'scratch operand']
  #allocation5 [shape = 'f32[8,32]{1,0:T(8,128)}', space=vmem, size = 0x1000, scoped, tag = 'scratch operand']
  %s0 = inlined_call_operand.hbm [shape: f32[2,8,16], index: 0, kind: input, shape index: {}]
  %s1 = inlined_call_operand.hbm [shape: f32[2,8,16], index: 1, kind: input, shape index: {}]
  %s2 = inlined_call_operand.hbm [shape: f32[2,8,16], index: 2, kind: input, shape index: {}]
  %s3 = inlined_call_operand.hbm [shape: f32[16,32], index: 3, kind: input, shape index: {}]
  %s4 = inlined_call_operand.vmem [shape: f32[1,32], index: 4, kind: input, shape index: {}]
  %s5 = inlined_call_operand.hbm [shape: f32[16,32], index: 5, kind: input, shape index: {}]
  %s6 = inlined_call_operand.vmem [shape: f32[1,32], index: 6, kind: input, shape index: {}]
  %s7 = inlined_call_operand.hbm [shape: f32[16,32], index: 7, kind: input, shape index: {}]
  %s8 = inlined_call_operand.vmem [shape: f32[1,32], index: 8, kind: input, shape index: {}]
  %s9 = inlined_call_operand.hbm [shape: f32[32,32], index: 9, kind: input, shape index: {}]
  %s10 = inlined_call_operand.vmem [shape: f32[1,32], index: 10, kind: input, shape index: {}]
  %s11 = inlined_call_operand.vmem [shape: f32[4,32], index: 11, kind: input, shape index: {}]
  %s12 = inlined_call_operand.hbm [shape: f32[2,8,32], index: 12, kind: output, shape index: {}]
  %s13 = sld [smem:[#allocation0]]
  $region117: #{tpu_custom_call.1} parent=0
    _
  %s15 = ssub.s32 1, %s13
  %s16 = scalar_select 0, %s15, %s13
  $region1: #{tpu_custom_call.1} parent=0
    #allocation6 [shape = 'u8[8192]{0}', space=vmem, size = 0x2000, scoped, tag = 'input window, operand 0']
    #allocation7 [shape = 's32[2]{0}', space=sflag, size = 0x8, scoped, tag = 'scoped memory for tpu_custom_call.1']
    #allocation8 [shape = 's32[2]{0}', space=sflag, size = 0x8, scoped, tag = 'scoped memory for tpu_custom_call.1']
    #allocation9 [shape = 'u8[8192]{0}', space=vmem, size = 0x2000, scoped, tag = 'input window, operand 1']
    #allocation10 [shape = 's32[2]{0}', space=sflag, size = 0x8, scoped, tag = 'scoped memory for tpu_custom_call.1']
    #allocation11 [shape = 'u8[8192]{0}', space=vmem, size = 0x2000, scoped, tag = 'input window, operand 2']
    #allocation12 [shape = 'u8[8192]{0}', space=vmem, size = 0x2000, scoped, tag = 'input window, operand 3, single buffered']
    #allocation13 [shape = 's32[1]{0}', space=sflag, size = 0x4, scoped, tag = 'scoped memory for tpu_custom_call.1']
    #allocation14 [shape = 'u8[8192]{0}', space=vmem, size = 0x2000, scoped, tag = 'input window, operand 5, single buffered']
    #allocation15 [shape = 'u8[8192]{0}', space=vmem, size = 0x2000, scoped, tag = 'input window, operand 7, single buffered']
    #allocation16 [shape = 's32[1]{0}', space=sflag, size = 0x4, scoped, tag = 'scoped memory for tpu_custom_call.1']
    #allocation17 [shape = 'u8[16384]{0}', space=vmem, size = 0x4000, scoped, tag = 'input window, operand 9, single buffered']
    #allocation18 [shape = 'u8[8192]{0}', space=vmem, size = 0x2000, scoped, tag = 'output window, operand 0']
    %17 = vsyncpa [#allocation7], 0
    %s18 = scalar_lea.sflag [#allocation7], 1
    %19 = vsyncpa %s18, 0
    %20 = vsyncpa [#allocation10], 0
    %s21 = scalar_lea.sflag [#allocation10], 1
    %22 = vsyncpa %s21, 0
    %23 = vsyncpa [#allocation13], 0
    %24 = vsyncpa [#allocation16], 0
    %25 = vsyncpa [#allocation8], 0
    %s26 = scalar_lea.sflag [#allocation8], 1
    %27 = vsyncpa %s26, 0
    loop: start=0, step=1, limit=4
    $region2: #{tpu_custom_call.1} parent=1 // loop_pre_header
      _
    $region3: #{tpu_custom_call.1} parent=1 // loop_header
      %s29 = sphi 0, %s33
      %p30 = scmp.ge.s32.totalorder %s29, 4
      %s36 = sphi 0, %s55
      %s37 = sphi 0, %s51
      %s38 = sphi 0, %s47
      %s39 = sphi 0, %s36
      %s40 = sphi 0, %s37
      %s41 = sphi 0, %s38
      %s42 = sphi 0, %s39
      %s43 = sphi 0, %s40
      %s44 = sphi 0, %s41
      %s60 = sphi 0, %s62
      %s63 = sphi 0, %s60
      %s64 = sphi 0, %s63
      %s80 = sphi 0, %s64
      %s88 = sphi 0, %s90
      %s91 = sphi 0, %s88
      %s92 = sphi 0, %s91
      %s108 = sphi 0, %s92
      %s116 = sphi 0, %s118
      %s119 = sphi 0, %s116
      %s120 = sphi 0, %s119
      %s136 = sphi 0, %s120
      %s140 = sphi 0, %s140
      %s142 = sphi 0, %s140
      %s143 = sphi 0, %s142
      %s157 = sphi 0, %s143
      %s161 = sphi 0, %s161
      %s163 = sphi 0, %s161
      %s164 = sphi 0, %s163
      %s178 = sphi 0, %s164
      %s182 = sphi 0, %s182
      %s184 = sphi 0, %s182
      %s185 = sphi 0, %s184
      %s199 = sphi 0, %s185
      %s203 = sphi 0, %s203
      %s205 = sphi 0, %s203
      %s206 = sphi 0, %s205
      %s220 = sphi 0, %s206
      %s224 = sphi 0, %s224
      %s226 = sphi 0, %s224
      %s227 = sphi 0, %s226
      %s241 = sphi 0, %s227
      %s245 = sphi 0, %s245
      %s247 = sphi 0, %s245
      %s248 = sphi 0, %s247
      %s262 = sphi 0, %s248
      %s266 = sphi 0, %s266
      %s268 = sphi 0, %s266
      %s269 = sphi 0, %s268
      %s283 = sphi 0, %s269
      %s287 = sphi 0, %s287
      %s289 = sphi 0, %s287
      %s290 = sphi 0, %s289
      %s304 = sphi 0, %s290
      %s308 = sphi 0, %s308
      %s310 = sphi 0, %s308
      %s311 = sphi 0, %s310
      %s325 = sphi 0, %s311
      %s333 = sphi 0, %s335
      %s336 = sphi 0, %s333
      %s337 = sphi 0, %s336
      %s353 = sphi 0, %s337
    $region4: #{tpu_custom_call.1} parent=1 // loop_header_branch
      %32 = sbr.rel (%p30) target = $region8
    $region5: #{tpu_custom_call.1} parent=1 // loop_body
      %s34 = ssub.s32 %s29, 1
      %s35 = ssub.s32 %s29, 2
      %s45 = sadd.s32 1, %s38
      %p46 = scmp.ge.s32.totalorder %s45, 1
      %s47 = scalar_select %p46, 0, %s45
      %s48 = sadd.s32 1, %s37
      %s49 = scalar_select %p46, %s48, %s37
      %p50 = scmp.ge.s32.totalorder %s49, 1
      %s51 = scalar_select %p50, 0, %s49
      %s52 = sadd.s32 1, %s36
      %s53 = scalar_select %p50, %s52, %s36
      %p54 = scmp.ge.s32.totalorder %s53, 2
      %s55 = scalar_select %p54, 0, %s53
      %s56 = ssub.s32 %s36, %s55
      %s57 = ssub.s32 %s37, %s51
      %s58 = sor.u32 %s56, %s57
      %p59 = scmp.eq.s32.totalorder %s58, 0
      %s61 = sadd.s32 %s60, 1
      %s62 = scalar_select %p59, %s60, %s61
      %p65 = pneg %p59
      %p66 = scmp.eq.s32.totalorder %s29, 1
      %p67 = por %p65, %p66
      %p68 = scmp.ne.s32.totalorder %s60, %s63
      %p69 = scmp.eq.s32.totalorder %s29, 0
      %p70 = por %p68, %p69
      %p71 = scmp.ne.s32.totalorder %s60, %s63
      %p72 = scmp.eq.s32.totalorder %s34, 1
      %p73 = por %p71, %p72
      %p74 = scmp.ne.s32.totalorder %s63, %s64
      %p75 = scmp.eq.s32.totalorder %s34, 0
      %p76 = por %p74, %p75
      %p77 = scmp.ne.s32.totalorder %s63, %s64
      %p78 = scmp.eq.s32.totalorder %s35, 1
      %p79 = por %p77, %p78
      %p81 = scmp.ne.s32.totalorder %s64, %s80
      %p82 = scmp.eq.s32.totalorder %s35, 0
      %p83 = por %p81, %p82
      %s84 = ssub.s32 %s36, %s55
      %s85 = ssub.s32 %s38, %s47
      %s86 = sor.u32 %s84, %s85
      %p87 = scmp.eq.s32.totalorder %s86, 0
      %s89 = sadd.s32 %s88, 1
      %s90 = scalar_select %p87, %s88, %s89
      %p93 = pneg %p87
      %p94 = scmp.eq.s32.totalorder %s29, 1
      %p95 = por %p93, %p94
      %p96 = scmp.ne.s32.totalorder %s88, %s91
      %p97 = scmp.eq.s32.totalorder %s29, 0
      %p98 = por %p96, %p97
      %p99 = scmp.ne.s32.totalorder %s88, %s91
      %p100 = scmp.eq.s32.totalorder %s34, 1
      %p101 = por %p99, %p100
      %p102 = scmp.ne.s32.totalorder %s91, %s92
      %p103 = scmp.eq.s32.totalorder %s34, 0
      %p104 = por %p102, %p103
      %p105 = scmp.ne.s32.totalorder %s91, %s92
      %p106 = scmp.eq.s32.totalorder %s35, 1
      %p107 = por %p105, %p106
      %p109 = scmp.ne.s32.totalorder %s92, %s108
      %p110 = scmp.eq.s32.totalorder %s35, 0
      %p111 = por %p109, %p110
      %s112 = ssub.s32 %s36, %s55
      %s113 = ssub.s32 %s38, %s47
      %s114 = sor.u32 %s112, %s113
      %p115 = scmp.eq.s32.totalorder %s114, 0
      %s117 = sadd.s32 %s116, 1
      %s118 = scalar_select %p115, %s116, %s117
      %p121 = pneg %p115
      %p122 = scmp.eq.s32.totalorder %s29, 1
      %p123 = por %p121, %p122
      %p124 = scmp.ne.s32.totalorder %s116, %s119
      %p125 = scmp.eq.s32.totalorder %s29, 0
      %p126 = por %p124, %p125
      %p127 = scmp.ne.s32.totalorder %s116, %s119
      %p128 = scmp.eq.s32.totalorder %s34, 1
      %p129 = por %p127, %p128
      %p130 = scmp.ne.s32.totalorder %s119, %s120
      %p131 = scmp.eq.s32.totalorder %s34, 0
      %p132 = por %p130, %p131
      %p133 = scmp.ne.s32.totalorder %s119, %s120
      %p134 = scmp.eq.s32.totalorder %s35, 1
      %p135 = por %p133, %p134
      %p137 = scmp.ne.s32.totalorder %s120, %s136
      %p138 = scmp.eq.s32.totalorder %s35, 0
      %p139 = por %p137, %p138
      %s141 = sadd.s32 %s140, 1
      %p144 = scmp.eq.s32.totalorder %s29, 1
      %p145 = scmp.ne.s32.totalorder %s140, %s142
      %p146 = scmp.eq.s32.totalorder %s29, 0
      %p147 = por %p145, %p146
      %p148 = scmp.ne.s32.totalorder %s140, %s142
      %p149 = scmp.eq.s32.totalorder %s34, 1
      %p150 = por %p148, %p149
      %p151 = scmp.ne.s32.totalorder %s142, %s143
      %p152 = scmp.eq.s32.totalorder %s34, 0
      %p153 = por %p151, %p152
      %p154 = scmp.ne.s32.totalorder %s142, %s143
      %p155 = scmp.eq.s32.totalorder %s35, 1
      %p156 = por %p154, %p155
      %p158 = scmp.ne.s32.totalorder %s143, %s157
      %p159 = scmp.eq.s32.totalorder %s35, 0
      %p160 = por %p158, %p159
      %s162 = sadd.s32 %s161, 1
      %p165 = scmp.eq.s32.totalorder %s29, 1
      %p166 = scmp.ne.s32.totalorder %s161, %s163
      %p167 = scmp.eq.s32.totalorder %s29, 0
      %p168 = por %p166, %p167
      %p169 = scmp.ne.s32.totalorder %s161, %s163
      %p170 = scmp.eq.s32.totalorder %s34, 1
      %p171 = por %p169, %p170
      %p172 = scmp.ne.s32.totalorder %s163, %s164
      %p173 = scmp.eq.s32.totalorder %s34, 0
      %p174 = por %p172, %p173
      %p175 = scmp.ne.s32.totalorder %s163, %s164
      %p176 = scmp.eq.s32.totalorder %s35, 1
      %p177 = por %p175, %p176
      %p179 = scmp.ne.s32.totalorder %s164, %s178
      %p180 = scmp.eq.s32.totalorder %s35, 0
      %p181 = por %p179, %p180
      %s183 = sadd.s32 %s182, 1
      %p186 = scmp.eq.s32.totalorder %s29, 1
      %p187 = scmp.ne.s32.totalorder %s182, %s184
      %p188 = scmp.eq.s32.totalorder %s29, 0
      %p189 = por %p187, %p188
      %p190 = scmp.ne.s32.totalorder %s182, %s184
      %p191 = scmp.eq.s32.totalorder %s34, 1
      %p192 = por %p190, %p191
      %p193 = scmp.ne.s32.totalorder %s184, %s185
      %p194 = scmp.eq.s32.totalorder %s34, 0
      %p195 = por %p193, %p194
      %p196 = scmp.ne.s32.totalorder %s184, %s185
      %p197 = scmp.eq.s32.totalorder %s35, 1
      %p198 = por %p196, %p197
      %p200 = scmp.ne.s32.totalorder %s185, %s199
      %p201 = scmp.eq.s32.totalorder %s35, 0
      %p202 = por %p200, %p201
      %s204 = sadd.s32 %s203, 1
      %p207 = scmp.eq.s32.totalorder %s29, 1
      %p208 = scmp.ne.s32.totalorder %s203, %s205
      %p209 = scmp.eq.s32.totalorder %s29, 0
      %p210 = por %p208, %p209
      %p211 = scmp.ne.s32.totalorder %s203, %s205
      %p212 = scmp.eq.s32.totalorder %s34, 1
      %p213 = por %p211, %p212
      %p214 = scmp.ne.s32.totalorder %s205, %s206
      %p215 = scmp.eq.s32.totalorder %s34, 0
      %p216 = por %p214, %p215
      %p217 = scmp.ne.s32.totalorder %s205, %s206
      %p218 = scmp.eq.s32.totalorder %s35, 1
      %p219 = por %p217, %p218
      %p221 = scmp.ne.s32.totalorder %s206, %s220
      %p222 = scmp.eq.s32.totalorder %s35, 0
      %p223 = por %p221, %p222
      %s225 = sadd.s32 %s224, 1
      %p228 = scmp.eq.s32.totalorder %s29, 1
      %p229 = scmp.ne.s32.totalorder %s224, %s226
      %p230 = scmp.eq.s32.totalorder %s29, 0
      %p231 = por %p229, %p230
      %p232 = scmp.ne.s32.totalorder %s224, %s226
      %p233 = scmp.eq.s32.totalorder %s34, 1
      %p234 = por %p232, %p233
      %p235 = scmp.ne.s32.totalorder %s226, %s227
      %p236 = scmp.eq.s32.totalorder %s34, 0
      %p237 = por %p235, %p236
      %p238 = scmp.ne.s32.totalorder %s226, %s227
      %p239 = scmp.eq.s32.totalorder %s35, 1
      %p240 = por %p238, %p239
      %p242 = scmp.ne.s32.totalorder %s227, %s241
      %p243 = scmp.eq.s32.totalorder %s35, 0
      %p244 = por %p242, %p243
      %s246 = sadd.s32 %s245, 1
      %p249 = scmp.eq.s32.totalorder %s29, 1
      %p250 = scmp.ne.s32.totalorder %s245, %s247
      %p251 = scmp.eq.s32.totalorder %s29, 0
      %p252 = por %p250, %p251
      %p253 = scmp.ne.s32.totalorder %s245, %s247
      %p254 = scmp.eq.s32.totalorder %s34, 1
      %p255 = por %p253, %p254
      %p256 = scmp.ne.s32.totalorder %s247, %s248
      %p257 = scmp.eq.s32.totalorder %s34, 0
      %p258 = por %p256, %p257
      %p259 = scmp.ne.s32.totalorder %s247, %s248
      %p260 = scmp.eq.s32.totalorder %s35, 1
      %p261 = por %p259, %p260
      %p263 = scmp.ne.s32.totalorder %s248, %s262
      %p264 = scmp.eq.s32.totalorder %s35, 0
      %p265 = por %p263, %p264
      %s267 = sadd.s32 %s266, 1
      %p270 = scmp.eq.s32.totalorder %s29, 1
      %p271 = scmp.ne.s32.totalorder %s266, %s268
      %p272 = scmp.eq.s32.totalorder %s29, 0
      %p273 = por %p271, %p272
      %p274 = scmp.ne.s32.totalorder %s266, %s268
      %p275 = scmp.eq.s32.totalorder %s34, 1
      %p276 = por %p274, %p275
      %p277 = scmp.ne.s32.totalorder %s268, %s269
      %p278 = scmp.eq.s32.totalorder %s34, 0
      %p279 = por %p277, %p278
      %p280 = scmp.ne.s32.totalorder %s268, %s269
      %p281 = scmp.eq.s32.totalorder %s35, 1
      %p282 = por %p280, %p281
      %p284 = scmp.ne.s32.totalorder %s269, %s283
      %p285 = scmp.eq.s32.totalorder %s35, 0
      %p286 = por %p284, %p285
      %s288 = sadd.s32 %s287, 1
      %p291 = scmp.eq.s32.totalorder %s29, 1
      %p292 = scmp.ne.s32.totalorder %s287, %s289
      %p293 = scmp.eq.s32.totalorder %s29, 0
      %p294 = por %p292, %p293
      %p295 = scmp.ne.s32.totalorder %s287, %s289
      %p296 = scmp.eq.s32.totalorder %s34, 1
      %p297 = por %p295, %p296
      %p298 = scmp.ne.s32.totalorder %s289, %s290
      %p299 = scmp.eq.s32.totalorder %s34, 0
      %p300 = por %p298, %p299
      %p301 = scmp.ne.s32.totalorder %s289, %s290
      %p302 = scmp.eq.s32.totalorder %s35, 1
      %p303 = por %p301, %p302
      %p305 = scmp.ne.s32.totalorder %s290, %s304
      %p306 = scmp.eq.s32.totalorder %s35, 0
      %p307 = por %p305, %p306
      %s309 = sadd.s32 %s308, 1
      %p312 = scmp.eq.s32.totalorder %s29, 1
      %p313 = scmp.ne.s32.totalorder %s308, %s310
      %p314 = scmp.eq.s32.totalorder %s29, 0
      %p315 = por %p313, %p314
      %p316 = scmp.ne.s32.totalorder %s308, %s310
      %p317 = scmp.eq.s32.totalorder %s34, 1
      %p318 = por %p316, %p317
      %p319 = scmp.ne.s32.totalorder %s310, %s311
      %p320 = scmp.eq.s32.totalorder %s34, 0
      %p321 = por %p319, %p320
      %p322 = scmp.ne.s32.totalorder %s310, %s311
      %p323 = scmp.eq.s32.totalorder %s35, 1
      %p324 = por %p322, %p323
      %p326 = scmp.ne.s32.totalorder %s311, %s325
      %p327 = scmp.eq.s32.totalorder %s35, 0
      %p328 = por %p326, %p327
      %s329 = ssub.s32 %s36, %s55
      %s330 = ssub.s32 %s37, %s51
      %s331 = sor.u32 %s329, %s330
      %p332 = scmp.eq.s32.totalorder %s331, 0
      %s334 = sadd.s32 %s333, 1
      %s335 = scalar_select %p332, %s333, %s334
      %p338 = pneg %p332
      %p339 = scmp.eq.s32.totalorder %s29, 1
      %p340 = por %p338, %p339
      %p341 = scmp.ne.s32.totalorder %s333, %s336
      %p342 = scmp.eq.s32.totalorder %s29, 0
      %p343 = por %p341, %p342
      %p344 = scmp.ne.s32.totalorder %s333, %s336
      %p345 = scmp.eq.s32.totalorder %s34, 1
      %p346 = por %p344, %p345
      %p347 = scmp.ne.s32.totalorder %s336, %s337
      %p348 = scmp.eq.s32.totalorder %s34, 0
      %p349 = por %p347, %p348
      %p350 = scmp.ne.s32.totalorder %s336, %s337
      %p351 = scmp.eq.s32.totalorder %s35, 1
      %p352 = por %p350, %p351
      %p354 = scmp.ne.s32.totalorder %s337, %s353
      %p355 = scmp.eq.s32.totalorder %s35, 0
      %p356 = por %p354, %p355
      %p357 = scmp.le.s32.totalorder 1, %s29
      %p358 = scmp.lt.s32.totalorder %s29, 3
      %p359 = pnand %p357, %p358
      %p360 = pneg %p359
      // Predicated region
      $region9: #{tpu_custom_call.1} parent=5 // pred_check
        _
      $region10: #{tpu_custom_call.1} parent=5 // pred_check_branch
        %362 = sbr.rel (%p359) target = $region12
      $region11: #{tpu_custom_call.1} parent=5 // pred_region
        %s363 = ssub.s32 %s29, 1
        // Predicated region
        $region13: #{tpu_custom_call.1} parent=11 // pred_check
          %p364 = pneg %p153
        $region14: #{tpu_custom_call.1} parent=11 // pred_check_branch
          %366 = sbr.rel (%p364) target = $region16
        $region15: #{tpu_custom_call.1} parent=11 // pred_region
          %s368 = ssub.s32 256, 256
          %369 = vsyncadd [#allocation13], %s368
          %s370 = sshll.u32 [#allocation12], 4
          %s371 = int_to_ptr.vmem [resolvable:$true] %s370
          %376 = dma.hbm_to_vmem [thread:$0]  %s3, 256, %s371, [#allocation13], 128, 128, 8
        $region16: #{tpu_custom_call.1} parent=11 // pred_fallthru
          _
        // Predicated region
        $region17: #{tpu_custom_call.1} parent=11 // pred_check
          %p377 = pneg %p174
        $region18: #{tpu_custom_call.1} parent=11 // pred_check_branch
          %379 = sbr.rel (%p377) target = $region20
        $region19: #{tpu_custom_call.1} parent=11 // pred_region
          _
        $region20: #{tpu_custom_call.1} parent=11 // pred_fallthru
          _
        // Predicated region
        $region21: #{tpu_custom_call.1} parent=11 // pred_check
          %p380 = pneg %p195
        $region22: #{tpu_custom_call.1} parent=11 // pred_check_branch
          %382 = sbr.rel (%p380) target = $region24
        $region23: #{tpu_custom_call.1} parent=11 // pred_region
          %s384 = ssub.s32 256, 256
          %385 = vsyncadd [#allocation13], %s384
          %s386 = sshll.u32 [#allocation14], 4
          %s387 = int_to_ptr.vmem [resolvable:$true] %s386
          %392 = dma.hbm_to_vmem [thread:$0]  %s5, 256, %s387, [#allocation13], 128, 128, 8
        $region24: #{tpu_custom_call.1} parent=11 // pred_fallthru
          _
        // Predicated region
        $region25: #{tpu_custom_call.1} parent=11 // pred_check
          %p393 = pneg %p216
        $region26: #{tpu_custom_call.1} parent=11 // pred_check_branch
          %395 = sbr.rel (%p393) target = $region28
        $region27: #{tpu_custom_call.1} parent=11 // pred_region
          _
        $region28: #{tpu_custom_call.1} parent=11 // pred_fallthru
          _
        // Predicated region
        $region29: #{tpu_custom_call.1} parent=11 // pred_check
          %p396 = pneg %p237
        $region30: #{tpu_custom_call.1} parent=11 // pred_check_branch
          %398 = sbr.rel (%p396) target = $region32
        $region31: #{tpu_custom_call.1} parent=11 // pred_region
          %s400 = ssub.s32 256, 256
          %401 = vsyncadd [#allocation16], %s400
          %s402 = sshll.u32 [#allocation15], 4
          %s403 = int_to_ptr.vmem [resolvable:$true] %s402
          %408 = dma.hbm_to_vmem [thread:$0]  %s7, 256, %s403, [#allocation16], 128, 128, 8
        $region32: #{tpu_custom_call.1} parent=11 // pred_fallthru
          _
        // Predicated region
        $region33: #{tpu_custom_call.1} parent=11 // pred_check
          %p409 = pneg %p258
        $region34: #{tpu_custom_call.1} parent=11 // pred_check_branch
          %411 = sbr.rel (%p409) target = $region36
        $region35: #{tpu_custom_call.1} parent=11 // pred_region
          _
        $region36: #{tpu_custom_call.1} parent=11 // pred_fallthru
          _
        // Predicated region
        $region37: #{tpu_custom_call.1} parent=11 // pred_check
          %p412 = pneg %p279
        $region38: #{tpu_custom_call.1} parent=11 // pred_check_branch
          %414 = sbr.rel (%p412) target = $region40
        $region39: #{tpu_custom_call.1} parent=11 // pred_region
          %s416 = ssub.s32 512, 512
          %417 = vsyncadd [#allocation16], %s416
          %s418 = sshll.u32 [#allocation17], 4
          %s419 = int_to_ptr.vmem [resolvable:$true] %s418
          %424 = dma.hbm_to_vmem [thread:$0]  %s9, 512, %s419, [#allocation16], 128, 128, 8
        $region40: #{tpu_custom_call.1} parent=11 // pred_fallthru
          _
        // Predicated region
        $region41: #{tpu_custom_call.1} parent=11 // pred_check
          %p425 = pneg %p300
        $region42: #{tpu_custom_call.1} parent=11 // pred_check_branch
          %427 = sbr.rel (%p425) target = $region44
        $region43: #{tpu_custom_call.1} parent=11 // pred_region
          _
        $region44: #{tpu_custom_call.1} parent=11 // pred_fallthru
          _
        // Predicated region
        $region45: #{tpu_custom_call.1} parent=11 // pred_check
          %p428 = pneg %p321
        $region46: #{tpu_custom_call.1} parent=11 // pred_check_branch
          %430 = sbr.rel (%p428) target = $region48
        $region47: #{tpu_custom_call.1} parent=11 // pred_region
          _
        $region48: #{tpu_custom_call.1} parent=11 // pred_fallthru
          _
      $region12: #{tpu_custom_call.1} parent=5 // pred_fallthru
        _
      %p431 = scmp.lt.s32.totalorder %s29, 2
      // Predicated region
      $region49: #{tpu_custom_call.1} parent=5 // pred_check
        %p432 = pneg %p431
      $region50: #{tpu_custom_call.1} parent=5 // pred_check_branch
        %434 = sbr.rel (%p432) target = $region52
      $region51: #{tpu_custom_call.1} parent=5 // pred_region
        // Predicated region
        $region53: #{tpu_custom_call.1} parent=51 // pred_check
          %p435 = pneg %p70
        $region54: #{tpu_custom_call.1} parent=51 // pred_check_branch
          %437 = sbr.rel (%p435) target = $region56
        $region55: #{tpu_custom_call.1} parent=51 // pred_region
          %s438 = sand.u32 %s60, 1
          %s439 = scalar_lea.sflag [#allocation7], %s438
          %s440 = sand.u32 %s60, 1
          %s441 = smul.addr %s440, 8
          %s442 = scalar_lea.vmem [#allocation6], %s441
          %s444 = ssub.s32 128, 128
          %445 = vsyncadd %s439, %s444
          %s446 = sadd.s32 %s37, %s36
          %s447 = smul.addr %s446, 128
          %s448 = scalar_lea.hbm %s0, %s447
          %s450 = sshll.u32 %s442, 4
          %s451 = int_to_ptr.vmem [resolvable:$true] %s450
          %453 = dma.hbm_to_vmem [thread:$0]  %s448, 128, %s451, %s439
        $region56: #{tpu_custom_call.1} parent=51 // pred_fallthru
          _
        // Predicated region
        $region57: #{tpu_custom_call.1} parent=51 // pred_check
          %p454 = pneg %p98
        $region58: #{tpu_custom_call.1} parent=51 // pred_check_branch
          %456 = sbr.rel (%p454) target = $region60
        $region59: #{tpu_custom_call.1} parent=51 // pred_region
          %s457 = sand.u32 %s29, 1
          %s458 = scalar_lea.sflag [#allocation10], %s457
          %s459 = sand.u32 %s88, 1
          %s460 = smul.addr %s459, 8
          %s461 = scalar_lea.vmem [#allocation9], %s460
          %s463 = ssub.s32 128, 128
          %464 = vsyncadd %s458, %s463
          %s465 = sadd.s32 %s38, %s36
          %s466 = smul.addr %s465, 128
          %s467 = scalar_lea.hbm %s1, %s466
          %s469 = sshll.u32 %s461, 4
          %s470 = int_to_ptr.vmem [resolvable:$true] %s469
          %472 = dma.hbm_to_vmem [thread:$0]  %s467, 128, %s470, %s458
        $region60: #{tpu_custom_call.1} parent=51 // pred_fallthru
          _
        // Predicated region
        $region61: #{tpu_custom_call.1} parent=51 // pred_check
          %p473 = pneg %p126
        $region62: #{tpu_custom_call.1} parent=51 // pred_check_branch
          %475 = sbr.rel (%p473) target = $region64
        $region63: #{tpu_custom_call.1} parent=51 // pred_region
          %s476 = sand.u32 %s29, 1
          %s477 = scalar_lea.sflag [#allocation10], %s476
          %s478 = sand.u32 %s116, 1
          %s479 = smul.addr %s478, 8
          %s480 = scalar_lea.vmem [#allocation11], %s479
          %s482 = ssub.s32 128, 128
          %483 = vsyncadd %s477, %s482
          %s484 = sadd.s32 %s38, %s36
          %s485 = smul.addr %s484, 128
          %s486 = scalar_lea.hbm %s2, %s485
          %s488 = sshll.u32 %s480, 4
          %s489 = int_to_ptr.vmem [resolvable:$true] %s488
          %491 = dma.hbm_to_vmem [thread:$0]  %s486, 128, %s489, %s477
        $region64: #{tpu_custom_call.1} parent=51 // pred_fallthru
          _
      $region52: #{tpu_custom_call.1} parent=5 // pred_fallthru
        _
      %p492 = scmp.le.s32.totalorder 1, %s29
      %p493 = scmp.lt.s32.totalorder %s29, 3
      %p494 = pnand %p492, %p493
      %p495 = pneg %p494
      // Predicated region
      $region65: #{tpu_custom_call.1} parent=5 // pred_check
        _
      $region66: #{tpu_custom_call.1} parent=5 // pred_check_branch
        %497 = sbr.rel (%p494) target = $region68
      $region67: #{tpu_custom_call.1} parent=5 // pred_region
        %s498 = ssub.s32 %s29, 1
        %s499 = sand.u32 %s63, 1
        %s500 = scalar_lea.sflag [#allocation7], %s499
        %s501 = sand.u32 %s63, 1
        %s502 = smul.addr %s501, 8
        %s503 = scalar_lea.vmem [#allocation6], %s502
        // Predicated region
        $region69: #{tpu_custom_call.1} parent=67 // pred_check
          %p504 = pneg %p76
        $region70: #{tpu_custom_call.1} parent=67 // pred_check_branch
          %506 = sbr.rel (%p504) target = $region72
        $region71: #{tpu_custom_call.1} parent=67 // pred_region
          %507 = dma.done %s500, 128
        $region72: #{tpu_custom_call.1} parent=67 // pred_fallthru
          _
        %s508 = sand.u32 %s34, 1
        %s509 = scalar_lea.sflag [#allocation10], %s508
        %s510 = sand.u32 %s91, 1
        %s511 = smul.addr %s510, 8
        %s512 = scalar_lea.vmem [#allocation9], %s511
        // Predicated region
        $region73: #{tpu_custom_call.1} parent=67 // pred_check
          %p513 = pneg %p104
        $region74: #{tpu_custom_call.1} parent=67 // pred_check_branch
          %515 = sbr.rel (%p513) target = $region76
        $region75: #{tpu_custom_call.1} parent=67 // pred_region
          %516 = dma.done %s509, 128
        $region76: #{tpu_custom_call.1} parent=67 // pred_fallthru
          _
        %s517 = sand.u32 %s34, 1
        %s518 = scalar_lea.sflag [#allocation10], %s517
        %s519 = sand.u32 %s119, 1
        %s520 = smul.addr %s519, 8
        %s521 = scalar_lea.vmem [#allocation11], %s520
        // Predicated region
        $region77: #{tpu_custom_call.1} parent=67 // pred_check
          %p522 = pneg %p132
        $region78: #{tpu_custom_call.1} parent=67 // pred_check_branch
          %524 = sbr.rel (%p522) target = $region80
        $region79: #{tpu_custom_call.1} parent=67 // pred_region
          %525 = dma.done %s518, 128
        $region80: #{tpu_custom_call.1} parent=67 // pred_fallthru
          _
        // Predicated region
        $region81: #{tpu_custom_call.1} parent=67 // pred_check
          %p526 = pneg %p153
        $region82: #{tpu_custom_call.1} parent=67 // pred_check_branch
          %528 = sbr.rel (%p526) target = $region84
        $region83: #{tpu_custom_call.1} parent=67 // pred_region
          %529 = dma.done [#allocation13], 256
        $region84: #{tpu_custom_call.1} parent=67 // pred_fallthru
          _
        // Predicated region
        $region85: #{tpu_custom_call.1} parent=67 // pred_check
          %p530 = pneg %p195
        $region86: #{tpu_custom_call.1} parent=67 // pred_check_branch
          %532 = sbr.rel (%p530) target = $region88
        $region87: #{tpu_custom_call.1} parent=67 // pred_region
          %533 = dma.done [#allocation13], 256
        $region88: #{tpu_custom_call.1} parent=67 // pred_fallthru
          _
        // Predicated region
        $region89: #{tpu_custom_call.1} parent=67 // pred_check
          %p534 = pneg %p237
        $region90: #{tpu_custom_call.1} parent=67 // pred_check_branch
          %536 = sbr.rel (%p534) target = $region92
        $region91: #{tpu_custom_call.1} parent=67 // pred_region
          %537 = dma.done [#allocation16], 256
        $region92: #{tpu_custom_call.1} parent=67 // pred_fallthru
          _
        // Predicated region
        $region93: #{tpu_custom_call.1} parent=67 // pred_check
          %p538 = pneg %p279
        $region94: #{tpu_custom_call.1} parent=67 // pred_check_branch
          %540 = sbr.rel (%p538) target = $region96
        $region95: #{tpu_custom_call.1} parent=67 // pred_region
          %541 = dma.done [#allocation16], 512
        $region96: #{tpu_custom_call.1} parent=67 // pred_fallthru
          _
        %s542 = sand.u32 %s63, 1
        %s543 = scalar_lea.sflag [#allocation7], %s542
        %s544 = sand.u32 %s63, 1
        %s545 = smul.addr %s544, 8
        %s546 = scalar_lea.vmem [#allocation6], %s545
        %p547 = pneg %p76
        %p548 = pneg %p73
        %s549 = sand.u32 %s34, 1
        %s550 = scalar_lea.sflag [#allocation10], %s549
        %s551 = sand.u32 %s91, 1
        %s552 = smul.addr %s551, 8
        %s553 = scalar_lea.vmem [#allocation9], %s552
        %p554 = pneg %p104
        %p555 = pneg %p101
        %s556 = sand.u32 %s34, 1
        %s557 = scalar_lea.sflag [#allocation10], %s556
        %s558 = sand.u32 %s119, 1
        %s559 = smul.addr %s558, 8
        %s560 = scalar_lea.vmem [#allocation11], %s559
        %p561 = pneg %p132
        %p562 = pneg %p129
        %p563 = pneg %p153
        %p564 = pneg %p150
        %p565 = pneg %p174
        %p566 = pneg %p171
        %p567 = pneg %p195
        %p568 = pneg %p192
        %p569 = pneg %p216
        %p570 = pneg %p213
        %p571 = pneg %p237
        %p572 = pneg %p234
        %p573 = pneg %p258
        %p574 = pneg %p255
        %p575 = pneg %p279
        %p576 = pneg %p276
        %p577 = pneg %p300
        %p578 = pneg %p297
        %p579 = pneg %p321
        %p580 = pneg %p318
        %p581 = pneg %p349
        %p582 = pneg %p346
        %s583 = sand.u32 %s336, 1
        %s584 = scalar_lea.sflag [#allocation8], %s583
        %s585 = sand.u32 %s336, 1
        %s586 = smul.addr %s585, 8
        %s587 = scalar_lea.vmem [#allocation18], %s586
        %p588 = scmp.eq.s32.totalorder %s41, 0
        // Predicated region
        $region97: #{tpu_custom_call.1} parent=67 // pred_check
          %p589 = pneg %p588
        $region98: #{tpu_custom_call.1} parent=67 // pred_check_branch
          %591 = sbr.rel (%p589) target = $region100
        $region99: #{tpu_custom_call.1} parent=67 // pred_region
          %v592 = vld [vmem:[%s503] sm:$0xff]
          %v593 = vld [vmem:[#allocation12] sm:$0xff]
          %v594 = vld [vmem:[#allocation12 + $0x8] sm:$0xff]
          %v595 = vld [vmem:[%s4] sm:$0x1]
          %v597 = vlaneseq
          %v598 = vshrl.u32 %v597, 7
          %v599 = vsub.s32 0, %v598
          %v600 = vrot.slane %v595, %v599
          %vm602 = vcmask 130048
          %v604 = vsel %vm602, %v592, 0
          %606 = vmatprep.subr.mxu0 0.0
          %607 = vmatpush1.msra.mxu0 0.0
          %608 = vmatprep.subr.mxu0 0.0
          %609 = vmatpush1.msra.mxu0 0.0
          %610 = vmatprep.subr.mxu0 0.0
          %611 = vmatpush1.msra.mxu0 0.0
          %612 = vmatprep.subr.mxu0 0.0
          %613 = vmatpush1.msra.mxu0 0.0
          %614 = vmatprep.subr.mxu0 0.0
          %615 = vmatpush1.msra.mxu0 0.0
          %616 = vmatprep.subr.mxu0 0.0
          %617 = vmatpush1.msra.mxu0 0.0
          %618 = vmatprep.subr.mxu0 0.0
          %619 = vmatpush1.msra.mxu0 0.0
          %620 = vmatprep.subr.mxu0 0.0
          %621 = vmatpush1.msra.mxu0 0.0
          %622 = vmatprep.subr.mxu0 0.0
          %623 = vmatpush1.msra.mxu0 0.0
          %624 = vmatprep.subr.mxu0 0.0
          %625 = vmatpush1.msra.mxu0 0.0
          %626 = vmatprep.subr.mxu0 0.0
          %627 = vmatpush1.msra.mxu0 0.0
          %628 = vmatprep.subr.mxu0 0.0
          %629 = vmatpush1.msra.mxu0 0.0
          %630 = vmatprep.subr.mxu0 0.0
          %631 = vmatpush1.msra.mxu0 0.0
          %632 = vmatprep.subr.mxu0 0.0
          %633 = vmatpush1.msra.mxu0 0.0
          %634 = vmatprep.subr.mxu0 0.0
          %635 = vmatpush1.msra.mxu0 %v594
          %636 = vmatprep.subr.mxu0 0.0
          %637 = vmatpush1.msra.mxu0 %v593
          %638 = vmatprep.subr.mxu0 0.0
          %639 = vmatpush2.msra.mxu0 0.0
          %640 = vmatprep.subr.mxu0 0.0
          %641 = vmatpush2.msra.mxu0 0.0
          %642 = vmatprep.subr.mxu0 0.0
          %643 = vmatpush2.msra.mxu0 0.0
          %644 = vmatprep.subr.mxu0 0.0
          %645 = vmatpush2.msra.mxu0 0.0
          %646 = vmatprep.subr.mxu0 0.0
          %647 = vmatpush2.msra.mxu0 0.0
          %648 = vmatprep.subr.mxu0 0.0
          %649 = vmatpush2.msra.mxu0 0.0
          %650 = vmatprep.subr.mxu0 0.0
          %651 = vmatpush2.msra.mxu0 0.0
          %652 = vmatprep.subr.mxu0 0.0
          %653 = vmatpush2.msra.mxu0 0.0
          %654 = vmatprep.subr.mxu0 0.0
          %655 = vmatpush2.msra.mxu0 0.0
          %656 = vmatprep.subr.mxu0 0.0
          %657 = vmatpush2.msra.mxu0 0.0
          %658 = vmatprep.subr.mxu0 0.0
          %659 = vmatpush2.msra.mxu0 0.0
          %660 = vmatprep.subr.mxu0 0.0
          %661 = vmatpush2.msra.mxu0 0.0
          %662 = vmatprep.subr.mxu0 0.0
          %663 = vmatpush2.msra.mxu0 0.0
          %664 = vmatprep.subr.mxu0 0.0
          %665 = vmatpush2.msra.mxu0 0.0
          %666 = vmatprep.subr.mxu0 0.0
          %667 = vmatpush2.msra.mxu0 0.0
          %668 = vmatprep.subr.mxu0 0.0
          %669 = vmatpush2.msra.mxu0 0.0
          %670 = vmatprep.mubr.f32.mxu0 0.0
          %671 = vmatmul.mubr.f32.gmra.mxu0 %v604
          %v672 = vpop.f32.mrf.mxu0
          %v673 = vadd.f32 %v600, %v672
          %v674 = vpop.f32.mrf.mxu0
          %675 = vdwg.mxu0
          %vm676 = vcmask 261120
          %677 = vst.msk [vmem:[#allocation2] sm:$0xff] %vm676, %v673
          %vm678 = vcmask 31744
          %679 = vst.msk [vmem:[#allocation3] sm:$0xff] %vm678, -inf
          %680 = vst.msk [vmem:[#allocation4] sm:$0xff] %vm678, 0.0
          %681 = vst.msk [vmem:[#allocation5] sm:$0xff] %vm676, 0.0
        $region100: #{tpu_custom_call.1} parent=67 // pred_fallthru
          _
        %v682 = vld [vmem:[%s512] sm:$0xff]
        %v683 = vld [vmem:[#allocation14] sm:$0xff]
        %v684 = vld [vmem:[#allocation14 + $0x8] sm:$0xff]
        %v685 = vld [vmem:[%s6] sm:$0x1]
        %v687 = vlaneseq
        %v688 = vshrl.u32 %v687, 7
        %v689 = vsub.s32 0, %v688
        %v690 = vrot.slane %v685, %v689
        %vm692 = vcmask 130048
        %v694 = vsel %vm692, %v682, 0
        %696 = vmatprep.subr.mxu0 0.0
        %697 = vmatpush1.msra.mxu0 0.0
        %698 = vmatprep.subr.mxu0 0.0
        %699 = vmatpush1.msra.mxu0 0.0
        %700 = vmatprep.subr.mxu0 0.0
        %701 = vmatpush1.msra.mxu0 0.0
        %702 = vmatprep.subr.mxu0 0.0
        %703 = vmatpush1.msra.mxu0 0.0
        %704 = vmatprep.subr.mxu0 0.0
        %705 = vmatpush1.msra.mxu0 0.0
        %706 = vmatprep.subr.mxu0 0.0
        %707 = vmatpush1.msra.mxu0 0.0
        %708 = vmatprep.subr.mxu0 0.0
        %709 = vmatpush1.msra.mxu0 0.0
        %710 = vmatprep.subr.mxu0 0.0
        %711 = vmatpush1.msra.mxu0 0.0
        %712 = vmatprep.subr.mxu0 0.0
        %713 = vmatpush1.msra.mxu0 0.0
        %714 = vmatprep.subr.mxu0 0.0
        %715 = vmatpush1.msra.mxu0 0.0
        %716 = vmatprep.subr.mxu0 0.0
        %717 = vmatpush1.msra.mxu0 0.0
        %718 = vmatprep.subr.mxu0 0.0
        %719 = vmatpush1.msra.mxu0 0.0
        %720 = vmatprep.subr.mxu0 0.0
        %721 = vmatpush1.msra.mxu0 0.0
        %722 = vmatprep.subr.mxu0 0.0
        %723 = vmatpush1.msra.mxu0 0.0
        %724 = vmatprep.subr.mxu0 0.0
        %725 = vmatpush1.msra.mxu0 %v684
        %726 = vmatprep.subr.mxu0 0.0
        %727 = vmatpush1.msra.mxu0 %v683
        %728 = vmatprep.subr.mxu0 0.0
        %729 = vmatpush2.msra.mxu0 0.0
        %730 = vmatprep.subr.mxu0 0.0
        %731 = vmatpush2.msra.mxu0 0.0
        %732 = vmatprep.subr.mxu0 0.0
        %733 = vmatpush2.msra.mxu0 0.0
        %734 = vmatprep.subr.mxu0 0.0
        %735 = vmatpush2.msra.mxu0 0.0
        %736 = vmatprep.subr.mxu0 0.0
        %737 = vmatpush2.msra.mxu0 0.0
        %738 = vmatprep.subr.mxu0 0.0
        %739 = vmatpush2.msra.mxu0 0.0
        %740 = vmatprep.subr.mxu0 0.0
        %741 = vmatpush2.msra.mxu0 0.0
        %742 = vmatprep.subr.mxu0 0.0
        %743 = vmatpush2.msra.mxu0 0.0
        %744 = vmatprep.subr.mxu0 0.0
        %745 = vmatpush2.msra.mxu0 0.0
        %746 = vmatprep.subr.mxu0 0.0
        %747 = vmatpush2.msra.mxu0 0.0
        %748 = vmatprep.subr.mxu0 0.0
        %749 = vmatpush2.msra.mxu0 0.0
        %750 = vmatprep.subr.mxu0 0.0
        %751 = vmatpush2.msra.mxu0 0.0
        %752 = vmatprep.subr.mxu0 0.0
        %753 = vmatpush2.msra.mxu0 0.0
        %754 = vmatprep.subr.mxu0 0.0
        %755 = vmatpush2.msra.mxu0 0.0
        %756 = vmatprep.subr.mxu0 0.0
        %757 = vmatpush2.msra.mxu0 0.0
        %758 = vmatprep.subr.mxu0 0.0
        %759 = vmatpush2.msra.mxu0 0.0
        %760 = vmatprep.mubr.f32.mxu0 0.0
        %761 = vmatmul.mubr.f32.gmra.mxu0 %v694
        %v762 = vpop.f32.mrf.mxu0
        %v763 = vadd.f32 %v690, %v762
        %v764 = vpop.f32.mrf.mxu0
        %765 = vdwg.mxu0
        %v766 = vld [vmem:[%s521] sm:$0xff]
        %v767 = vld [vmem:[#allocation15] sm:$0xff]
        %v768 = vld [vmem:[#allocation15 + $0x8] sm:$0xff]
        %v769 = vld [vmem:[%s8] sm:$0x1]
        %v771 = vlaneseq
        %v772 = vshrl.u32 %v771, 7
        %v773 = vsub.s32 0, %v772
        %v774 = vrot.slane %v769, %v773
        %v777 = vsel %vm692, %v766, 0
        %779 = vmatprep.subr.mxu0 0.0
        %780 = vmatpush1.msra.mxu0 0.0
        %781 = vmatprep.subr.mxu0 0.0
        %782 = vmatpush1.msra.mxu0 0.0
        %783 = vmatprep.subr.mxu0 0.0
        %784 = vmatpush1.msra.mxu0 0.0
        %785 = vmatprep.subr.mxu0 0.0
        %786 = vmatpush1.msra.mxu0 0.0
        %787 = vmatprep.subr.mxu0 0.0
        %788 = vmatpush1.msra.mxu0 0.0
        %789 = vmatprep.subr.mxu0 0.0
        %790 = vmatpush1.msra.mxu0 0.0
        %791 = vmatprep.subr.mxu0 0.0
        %792 = vmatpush1.msra.mxu0 0.0
        %793 = vmatprep.subr.mxu0 0.0
        %794 = vmatpush1.msra.mxu0 0.0
        %795 = vmatprep.subr.mxu0 0.0
        %796 = vmatpush1.msra.mxu0 0.0
        %797 = vmatprep.subr.mxu0 0.0
        %798 = vmatpush1.msra.mxu0 0.0
        %799 = vmatprep.subr.mxu0 0.0
        %800 = vmatpush1.msra.mxu0 0.0
        %801 = vmatprep.subr.mxu0 0.0
        %802 = vmatpush1.msra.mxu0 0.0
        %803 = vmatprep.subr.mxu0 0.0
        %804 = vmatpush1.msra.mxu0 0.0
        %805 = vmatprep.subr.mxu0 0.0
        %806 = vmatpush1.msra.mxu0 0.0
        %807 = vmatprep.subr.mxu0 0.0
        %808 = vmatpush1.msra.mxu0 %v768
        %809 = vmatprep.subr.mxu0 0.0
        %810 = vmatpush1.msra.mxu0 %v767
        %811 = vmatprep.subr.mxu0 0.0
        %812 = vmatpush2.msra.mxu0 0.0
        %813 = vmatprep.subr.mxu0 0.0
        %814 = vmatpush2.msra.mxu0 0.0
        %815 = vmatprep.subr.mxu0 0.0
        %816 = vmatpush2.msra.mxu0 0.0
        %817 = vmatprep.subr.mxu0 0.0
        %818 = vmatpush2.msra.mxu0 0.0
        %819 = vmatprep.subr.mxu0 0.0
        %820 = vmatpush2.msra.mxu0 0.0
        %821 = vmatprep.subr.mxu0 0.0
        %822 = vmatpush2.msra.mxu0 0.0
        %823 = vmatprep.subr.mxu0 0.0
        %824 = vmatpush2.msra.mxu0 0.0
        %825 = vmatprep.subr.mxu0 0.0
        %826 = vmatpush2.msra.mxu0 0.0
        %827 = vmatprep.subr.mxu0 0.0
        %828 = vmatpush2.msra.mxu0 0.0
        %829 = vmatprep.subr.mxu0 0.0
        %830 = vmatpush2.msra.mxu0 0.0
        %831 = vmatprep.subr.mxu0 0.0
        %832 = vmatpush2.msra.mxu0 0.0
        %833 = vmatprep.subr.mxu0 0.0
        %834 = vmatpush2.msra.mxu0 0.0
        %835 = vmatprep.subr.mxu0 0.0
        %836 = vmatpush2.msra.mxu0 0.0
        %837 = vmatprep.subr.mxu0 0.0
        %838 = vmatpush2.msra.mxu0 0.0
        %839 = vmatprep.subr.mxu0 0.0
        %840 = vmatpush2.msra.mxu0 0.0
        %841 = vmatprep.subr.mxu0 0.0
        %842 = vmatpush2.msra.mxu0 0.0
        %843 = vmatprep.mubr.f32.mxu0 0.0
        %844 = vmatmul.mubr.f32.gmra.mxu0 %v777
        %v845 = vpop.f32.mrf.mxu0
        %v846 = vadd.f32 %v774, %v845
        %v847 = vpop.f32.mrf.mxu0
        %848 = vdwg.mxu0
        %v849 = vld [vmem:[#allocation2] sm:$0xff]
        %vm850 = vcmask 64512
        %v852 = vsel %vm850, %v849, 0
        %v855 = vsel %vm850, %v763, 0
        %857 = vmatprep.subr.mxu0 0.0
        %858 = vmatpush1.xpose.msra.mxu0 0.0
        %859 = vmatprep.subr.mxu0 0.0
        %860 = vmatpush1.xpose.msra.mxu0 0.0
        %861 = vmatprep.subr.mxu0 0.0
        %862 = vmatpush1.xpose.msra.mxu0 0.0
        %863 = vmatprep.subr.mxu0 0.0
        %864 = vmatpush1.xpose.msra.mxu0 0.0
        %865 = vmatprep.subr.mxu0 0.0
        %866 = vmatpush1.xpose.msra.mxu0 0.0
        %867 = vmatprep.subr.mxu0 0.0
        %868 = vmatpush1.xpose.msra.mxu0 0.0
        %869 = vmatprep.subr.mxu0 0.0
        %870 = vmatpush1.xpose.msra.mxu0 0.0
        %871 = vmatprep.subr.mxu0 0.0
        %872 = vmatpush1.xpose.msra.mxu0 0.0
        %873 = vmatprep.subr.mxu0 0.0
        %874 = vmatpush1.xpose.msra.mxu0 0.0
        %875 = vmatprep.subr.mxu0 0.0
        %876 = vmatpush1.xpose.msra.mxu0 0.0
        %877 = vmatprep.subr.mxu0 0.0
        %878 = vmatpush1.xpose.msra.mxu0 0.0
        %879 = vmatprep.subr.mxu0 0.0
        %880 = vmatpush1.xpose.msra.mxu0 0.0
        %881 = vmatprep.subr.mxu0 0.0
        %882 = vmatpush1.xpose.msra.mxu0 0.0
        %883 = vmatprep.subr.mxu0 0.0
        %884 = vmatpush1.xpose.msra.mxu0 0.0
        %885 = vmatprep.subr.mxu0 0.0
        %886 = vmatpush1.xpose.msra.mxu0 0.0
        %887 = vmatprep.subr.mxu0 0.0
        %888 = vmatpush1.xpose.msra.mxu0 %v855
        %889 = vmatprep.subr.mxu0 0.0
        %890 = vmatpush2.xpose.msra.mxu0 0.0
        %891 = vmatprep.subr.mxu0 0.0
        %892 = vmatpush2.xpose.msra.mxu0 0.0
        %893 = vmatprep.subr.mxu0 0.0
        %894 = vmatpush2.xpose.msra.mxu0 0.0
        %895 = vmatprep.subr.mxu0 0.0
        %896 = vmatpush2.xpose.msra.mxu0 0.0
        %897 = vmatprep.subr.mxu0 0.0
        %898 = vmatpush2.xpose.msra.mxu0 0.0
        %899 = vmatprep.subr.mxu0 0.0
        %900 = vmatpush2.xpose.msra.mxu0 0.0
        %901 = vmatprep.subr.mxu0 0.0
        %902 = vmatpush2.xpose.msra.mxu0 0.0
        %903 = vmatprep.subr.mxu0 0.0
        %904 = vmatpush2.xpose.msra.mxu0 0.0
        %905 = vmatprep.subr.mxu0 0.0
        %906 = vmatpush2.xpose.msra.mxu0 0.0
        %907 = vmatprep.subr.mxu0 0.0
        %908 = vmatpush2.xpose.msra.mxu0 0.0
        %909 = vmatprep.subr.mxu0 0.0
        %910 = vmatpush2.xpose.msra.mxu0 0.0
        %911 = vmatprep.subr.mxu0 0.0
        %912 = vmatpush2.xpose.msra.mxu0 0.0
        %913 = vmatprep.subr.mxu0 0.0
        %914 = vmatpush2.xpose.msra.mxu0 0.0
        %915 = vmatprep.subr.mxu0 0.0
        %916 = vmatpush2.xpose.msra.mxu0 0.0
        %917 = vmatprep.subr.mxu0 0.0
        %918 = vmatpush2.xpose.msra.mxu0 0.0
        %919 = vmatprep.subr.mxu0 0.0
        %920 = vmatpush2.xpose.msra.mxu0 0.0
        %921 = vmatprep.mubr.f32.mxu0 0.0
        %922 = vmatmul.mubr.f32.gmra.mxu0 %v852
        %v923 = vpop.f32.mrf.mxu0
        %v924 = vadd.f32 0.0, %v923
        %v925 = vpop.f32.mrf.mxu0
        %926 = vdwg.mxu0
        %v927 = vld [vmem:[#allocation3] sm:$0xff]
        %v928 = vsel %vm850, %v924, -inf
        %929 = vmax.xlane.f32.xlu0 %v928
        %v930 = vpop.xlane.xlu0 %929
        %v931 = vmax.f32 %v927, %v930
        %v932 = vsub.f32 %v927, %v931
        %v933 = vmul.f32 %v932, 1.442695
        %v934 = vpow.pop %v933
        %936 = vset.pattern.permute.xlu0 0
        %937 = vperm.xlu0 %936, %v931
        %v938 = vpop.permute.xlu0 %937
        %v940 = vsub.f32 %v924, %v938
        %v941 = vmul.f32 %v940, 1.442695
        %v942 = vpow.pop %v941
        %v943 = vld [vmem:[#allocation4] sm:$0xff]
        %v944 = vmul.f32 %v934, %v943
        %v945 = vsel %vm850, %v942, 0.0
        %946 = vadd.xlane.f32.xlu0 %v945
        %v947 = vpop.xlane.xlu0 %946
        %v948 = vadd.f32 %v944, %v947
        %vm949 = vcmask 7168
        %950 = vst.msk [vmem:[#allocation4] sm:$0xff] %vm949, %v948
        %v951 = vld [vmem:[#allocation5] sm:$0xff]
        %953 = vset.pattern.permute.xlu0 0
        %954 = vperm.xlu0 %953, %v934
        %v955 = vpop.permute.xlu0 %954
        %v957 = vmul.f32 %v955, %v951
        %v959 = vsel %vm850, %v942, 0
        %961 = vmatprep.subr.mxu0 0.0
        %962 = vmatpush1.msra.mxu0 0.0
        %963 = vmatprep.subr.mxu0 0.0
        %964 = vmatpush1.msra.mxu0 0.0
        %965 = vmatprep.subr.mxu0 0.0
        %966 = vmatpush1.msra.mxu0 0.0
        %967 = vmatprep.subr.mxu0 0.0
        %968 = vmatpush1.msra.mxu0 0.0
        %969 = vmatprep.subr.mxu0 0.0
        %970 = vmatpush1.msra.mxu0 0.0
        %971 = vmatprep.subr.mxu0 0.0
        %972 = vmatpush1.msra.mxu0 0.0
        %973 = vmatprep.subr.mxu0 0.0
        %974 = vmatpush1.msra.mxu0 0.0
        %975 = vmatprep.subr.mxu0 0.0
        %976 = vmatpush1.msra.mxu0 0.0
        %977 = vmatprep.subr.mxu0 0.0
        %978 = vmatpush1.msra.mxu0 0.0
        %979 = vmatprep.subr.mxu0 0.0
        %980 = vmatpush1.msra.mxu0 0.0
        %981 = vmatprep.subr.mxu0 0.0
        %982 = vmatpush1.msra.mxu0 0.0
        %983 = vmatprep.subr.mxu0 0.0
        %984 = vmatpush1.msra.mxu0 0.0
        %985 = vmatprep.subr.mxu0 0.0
        %986 = vmatpush1.msra.mxu0 0.0
        %987 = vmatprep.subr.mxu0 0.0
        %988 = vmatpush1.msra.mxu0 0.0
        %989 = vmatprep.subr.mxu0 0.0
        %990 = vmatpush1.msra.mxu0 0.0
        %991 = vmatprep.subr.mxu0 0.0
        %992 = vmatpush1.msra.mxu0 %v846
        %993 = vmatprep.subr.mxu0 0.0
        %994 = vmatpush2.msra.mxu0 0.0
        %995 = vmatprep.subr.mxu0 0.0
        %996 = vmatpush2.msra.mxu0 0.0
        %997 = vmatprep.subr.mxu0 0.0
        %998 = vmatpush2.msra.mxu0 0.0
        %999 = vmatprep.subr.mxu0 0.0
        %1000 = vmatpush2.msra.mxu0 0.0
        %1001 = vmatprep.subr.mxu0 0.0
        %1002 = vmatpush2.msra.mxu0 0.0
        %1003 = vmatprep.subr.mxu0 0.0
        %1004 = vmatpush2.msra.mxu0 0.0
        %1005 = vmatprep.subr.mxu0 0.0
        %1006 = vmatpush2.msra.mxu0 0.0
        %1007 = vmatprep.subr.mxu0 0.0
        %1008 = vmatpush2.msra.mxu0 0.0
        %1009 = vmatprep.subr.mxu0 0.0
        %1010 = vmatpush2.msra.mxu0 0.0
        %1011 = vmatprep.subr.mxu0 0.0
        %1012 = vmatpush2.msra.mxu0 0.0
        %1013 = vmatprep.subr.mxu0 0.0
        %1014 = vmatpush2.msra.mxu0 0.0
        %1015 = vmatprep.subr.mxu0 0.0
        %1016 = vmatpush2.msra.mxu0 0.0
        %1017 = vmatprep.subr.mxu0 0.0
        %1018 = vmatpush2.msra.mxu0 0.0
        %1019 = vmatprep.subr.mxu0 0.0
        %1020 = vmatpush2.msra.mxu0 0.0
        %1021 = vmatprep.subr.mxu0 0.0
        %1022 = vmatpush2.msra.mxu0 0.0
        %1023 = vmatprep.subr.mxu0 0.0
        %1024 = vmatpush2.msra.mxu0 0.0
        %1025 = vmatprep.mubr.f32.mxu0 0.0
        %1026 = vmatmul.mubr.f32.gmra.mxu0 %v959
        %v1027 = vpop.f32.mrf.mxu0
        %v1028 = vadd.f32 0.0, %v1027
        %v1029 = vpop.f32.mrf.mxu0
        %1030 = vdwg.mxu0
        %v1031 = vadd.f32 %v957, %v1028
        %1032 = vst.msk [vmem:[#allocation5] sm:$0xff] %vm850, %v1031
        %1033 = vst.msk [vmem:[#allocation3] sm:$0xff] %vm949, %v931
        %1034 = vrot.lane.b32.xlu0 %v849, 120
        %v1035 = vpop.permute.xlu0 %1034
        %1036 = vrot.lane.b32.xlu0 %v763, 120
        %v1037 = vpop.permute.xlu0 %1036
        %v1038 = vsel %vm850, %v1035, 0
        %v1040 = vsel %vm850, %v1037, 0
        %1042 = vmatprep.subr.mxu0 0.0
        %1043 = vmatpush1.xpose.msra.mxu0 0.0
        %1044 = vmatprep.subr.mxu0 0.0
        %1045 = vmatpush1.xpose.msra.mxu0 0.0
        %1046 = vmatprep.subr.mxu0 0.0
        %1047 = vmatpush1.xpose.msra.mxu0 0.0
        %1048 = vmatprep.subr.mxu0 0.0
        %1049 = vmatpush1.xpose.msra.mxu0 0.0
        %1050 = vmatprep.subr.mxu0 0.0
        %1051 = vmatpush1.xpose.msra.mxu0 0.0
        %1052 = vmatprep.subr.mxu0 0.0
        %1053 = vmatpush1.xpose.msra.mxu0 0.0
        %1054 = vmatprep.subr.mxu0 0.0
        %1055 = vmatpush1.xpose.msra.mxu0 0.0
        %1056 = vmatprep.subr.mxu0 0.0
        %1057 = vmatpush1.xpose.msra.mxu0 0.0
        %1058 = vmatprep.subr.mxu0 0.0
        %1059 = vmatpush1.xpose.msra.mxu0 0.0
        %1060 = vmatprep.subr.mxu0 0.0
        %1061 = vmatpush1.xpose.msra.mxu0 0.0
        %1062 = vmatprep.subr.mxu0 0.0
        %1063 = vmatpush1.xpose.msra.mxu0 0.0
        %1064 = vmatprep.subr.mxu0 0.0
        %1065 = vmatpush1.xpose.msra.mxu0 0.0
        %1066 = vmatprep.subr.mxu0 0.0
        %1067 = vmatpush1.xpose.msra.mxu0 0.0
        %1068 = vmatprep.subr.mxu0 0.0
        %1069 = vmatpush1.xpose.msra.mxu0 0.0
        %1070 = vmatprep.subr.mxu0 0.0
        %1071 = vmatpush1.xpose.msra.mxu0 0.0
        %1072 = vmatprep.subr.mxu0 0.0
        %1073 = vmatpush1.xpose.msra.mxu0 %v1040
        %1074 = vmatprep.subr.mxu0 0.0
        %1075 = vmatpush2.xpose.msra.mxu0 0.0
        %1076 = vmatprep.subr.mxu0 0.0
        %1077 = vmatpush2.xpose.msra.mxu0 0.0
        %1078 = vmatprep.subr.mxu0 0.0
        %1079 = vmatpush2.xpose.msra.mxu0 0.0
        %1080 = vmatprep.subr.mxu0 0.0
        %1081 = vmatpush2.xpose.msra.mxu0 0.0
        %1082 = vmatprep.subr.mxu0 0.0
        %1083 = vmatpush2.xpose.msra.mxu0 0.0
        %1084 = vmatprep.subr.mxu0 0.0
        %1085 = vmatpush2.xpose.msra.mxu0 0.0
        %1086 = vmatprep.subr.mxu0 0.0
        %1087 = vmatpush2.xpose.msra.mxu0 0.0
        %1088 = vmatprep.subr.mxu0 0.0
        %1089 = vmatpush2.xpose.msra.mxu0 0.0
        %1090 = vmatprep.subr.mxu0 0.0
        %1091 = vmatpush2.xpose.msra.mxu0 0.0
        %1092 = vmatprep.subr.mxu0 0.0
        %1093 = vmatpush2.xpose.msra.mxu0 0.0
        %1094 = vmatprep.subr.mxu0 0.0
        %1095 = vmatpush2.xpose.msra.mxu0 0.0
        %1096 = vmatprep.subr.mxu0 0.0
        %1097 = vmatpush2.xpose.msra.mxu0 0.0
        %1098 = vmatprep.subr.mxu0 0.0
        %1099 = vmatpush2.xpose.msra.mxu0 0.0
        %1100 = vmatprep.subr.mxu0 0.0
        %1101 = vmatpush2.xpose.msra.mxu0 0.0
        %1102 = vmatprep.subr.mxu0 0.0
        %1103 = vmatpush2.xpose.msra.mxu0 0.0
        %1104 = vmatprep.subr.mxu0 0.0
        %1105 = vmatpush2.xpose.msra.mxu0 0.0
        %1106 = vmatprep.mubr.f32.mxu0 0.0
        %1107 = vmatmul.mubr.f32.gmra.mxu0 %v1038
        %v1108 = vpop.f32.mrf.mxu0
        %v1109 = vadd.f32 0.0, %v1108
        %v1110 = vpop.f32.mrf.mxu0
        %1111 = vdwg.mxu0
        %v1112 = vld [vmem:[#allocation3] sm:$0xff]
        %v1113 = vsel %vm850, %v1109, -inf
        %1114 = vmax.xlane.f32.xlu0 %v1113
        %v1115 = vpop.xlane.xlu0 %1114
        %v1116 = vmax.f32 %v1112, %v1115
        %v1117 = vsub.f32 %v1112, %v1116
        %v1118 = vmul.f32 %v1117, 1.442695
        %v1119 = vpow.pop %v1118
        %1121 = vset.pattern.permute.xlu0 1
        %1122 = vperm.xlu0 %1121, %v1116
        %v1123 = vpop.permute.xlu0 %1122
        %v1125 = vsub.f32 %v1109, %v1123
        %v1126 = vmul.f32 %v1125, 1.442695
        %v1127 = vpow.pop %v1126
        %v1128 = vld [vmem:[#allocation4] sm:$0xff]
        %v1129 = vmul.f32 %v1119, %v1128
        %v1130 = vsel %vm850, %v1127, 0.0
        %1131 = vadd.xlane.f32.xlu0 %v1130
        %v1132 = vpop.xlane.xlu0 %1131
        %v1133 = vadd.f32 %v1129, %v1132
        %vm1134 = vcmask 15368
        %1135 = vst.msk [vmem:[#allocation4] sm:$0xff] %vm1134, %v1133
        %v1136 = vld [vmem:[#allocation5] sm:$0xff]
        %1138 = vset.pattern.permute.xlu0 1
        %1139 = vperm.xlu0 %1138, %v1119
        %v1140 = vpop.permute.xlu0 %1139
        %v1142 = vmul.f32 %v1140, %v1136
        %1144 = vrot.lane.b32.xlu0 %v846, 120
        %v1145 = vpop.permute.xlu0 %1144
        %v1148 = vsel %vm850, %v1127, 0
        %1150 = vmatprep.subr.mxu0 0.0
        %1151 = vmatpush1.msra.mxu0 0.0
        %1152 = vmatprep.subr.mxu0 0.0
        %1153 = vmatpush1.msra.mxu0 0.0
        %1154 = vmatprep.subr.mxu0 0.0
        %1155 = vmatpush1.msra.mxu0 0.0
        %1156 = vmatprep.subr.mxu0 0.0
        %1157 = vmatpush1.msra.mxu0 0.0
        %1158 = vmatprep.subr.mxu0 0.0
        %1159 = vmatpush1.msra.mxu0 0.0
        %1160 = vmatprep.subr.mxu0 0.0
        %1161 = vmatpush1.msra.mxu0 0.0
        %1162 = vmatprep.subr.mxu0 0.0
        %1163 = vmatpush1.msra.mxu0 0.0
        %1164 = vmatprep.subr.mxu0 0.0
        %1165 = vmatpush1.msra.mxu0 0.0
        %1166 = vmatprep.subr.mxu0 0.0
        %1167 = vmatpush1.msra.mxu0 0.0
        %1168 = vmatprep.subr.mxu0 0.0
        %1169 = vmatpush1.msra.mxu0 0.0
        %1170 = vmatprep.subr.mxu0 0.0
        %1171 = vmatpush1.msra.mxu0 0.0
        %1172 = vmatprep.subr.mxu0 0.0
        %1173 = vmatpush1.msra.mxu0 0.0
        %1174 = vmatprep.subr.mxu0 0.0
        %1175 = vmatpush1.msra.mxu0 0.0
        %1176 = vmatprep.subr.mxu0 0.0
        %1177 = vmatpush1.msra.mxu0 0.0
        %1178 = vmatprep.subr.mxu0 0.0
        %1179 = vmatpush1.msra.mxu0 0.0
        %1180 = vmatprep.subr.mxu0 0.0
        %1181 = vmatpush1.msra.mxu0 %v1145
        %1182 = vmatprep.subr.mxu0 0.0
        %1183 = vmatpush2.msra.mxu0 0.0
        %1184 = vmatprep.subr.mxu0 0.0
        %1185 = vmatpush2.msra.mxu0 0.0
        %1186 = vmatprep.subr.mxu0 0.0
        %1187 = vmatpush2.msra.mxu0 0.0
        %1188 = vmatprep.subr.mxu0 0.0
        %1189 = vmatpush2.msra.mxu0 0.0
        %1190 = vmatprep.subr.mxu0 0.0
        %1191 = vmatpush2.msra.mxu0 0.0
        %1192 = vmatprep.subr.mxu0 0.0
        %1193 = vmatpush2.msra.mxu0 0.0
        %1194 = vmatprep.subr.mxu0 0.0
        %1195 = vmatpush2.msra.mxu0 0.0
        %1196 = vmatprep.subr.mxu0 0.0
        %1197 = vmatpush2.msra.mxu0 0.0
        %1198 = vmatprep.subr.mxu0 0.0
        %1199 = vmatpush2.msra.mxu0 0.0
        %1200 = vmatprep.subr.mxu0 0.0
        %1201 = vmatpush2.msra.mxu0 0.0
        %1202 = vmatprep.subr.mxu0 0.0
        %1203 = vmatpush2.msra.mxu0 0.0
        %1204 = vmatprep.subr.mxu0 0.0
        %1205 = vmatpush2.msra.mxu0 0.0
        %1206 = vmatprep.subr.mxu0 0.0
        %1207 = vmatpush2.msra.mxu0 0.0
        %1208 = vmatprep.subr.mxu0 0.0
        %1209 = vmatpush2.msra.mxu0 0.0
        %1210 = vmatprep.subr.mxu0 0.0
        %1211 = vmatpush2.msra.mxu0 0.0
        %1212 = vmatprep.subr.mxu0 0.0
        %1213 = vmatpush2.msra.mxu0 0.0
        %1214 = vmatprep.mubr.f32.mxu0 0.0
        %1215 = vmatmul.mubr.f32.gmra.mxu0 %v1148
        %v1216 = vpop.f32.mrf.mxu0
        %v1217 = vadd.f32 0.0, %v1216
        %v1218 = vpop.f32.mrf.mxu0
        %1219 = vdwg.mxu0
        %1221 = vrot.lane.b32.xlu0 %v1217, 8
        %v1222 = vpop.permute.xlu0 %1221
        %v1224 = vadd.f32 %v1142, %v1222
        %vm1225 = vcmask 130112
        %1226 = vst.msk [vmem:[#allocation5] sm:$0xff] %vm1225, %v1224
        %1227 = vst.msk [vmem:[#allocation3] sm:$0xff] %vm1134, %v1116
        %1228 = vrot.lane.b32.xlu0 %v849, 112
        %v1229 = vpop.permute.xlu0 %1228
        %1230 = vrot.lane.b32.xlu0 %v763, 112
        %v1231 = vpop.permute.xlu0 %1230
        %v1232 = vsel %vm850, %v1229, 0
        %v1234 = vsel %vm850, %v1231, 0
        %1236 = vmatprep.subr.mxu0 0.0
        %1237 = vmatpush1.xpose.msra.mxu0 0.0
        %1238 = vmatprep.subr.mxu0 0.0
        %1239 = vmatpush1.xpose.msra.mxu0 0.0
        %1240 = vmatprep.subr.mxu0 0.0
        %1241 = vmatpush1.xpose.msra.mxu0 0.0
        %1242 = vmatprep.subr.mxu0 0.0
        %1243 = vmatpush1.xpose.msra.mxu0 0.0
        %1244 = vmatprep.subr.mxu0 0.0
        %1245 = vmatpush1.xpose.msra.mxu0 0.0
        %1246 = vmatprep.subr.mxu0 0.0
        %1247 = vmatpush1.xpose.msra.mxu0 0.0
        %1248 = vmatprep.subr.mxu0 0.0
        %1249 = vmatpush1.xpose.msra.mxu0 0.0
        %1250 = vmatprep.subr.mxu0 0.0
        %1251 = vmatpush1.xpose.msra.mxu0 0.0
        %1252 = vmatprep.subr.mxu0 0.0
        %1253 = vmatpush1.xpose.msra.mxu0 0.0
        %1254 = vmatprep.subr.mxu0 0.0
        %1255 = vmatpush1.xpose.msra.mxu0 0.0
        %1256 = vmatprep.subr.mxu0 0.0
        %1257 = vmatpush1.xpose.msra.mxu0 0.0
        %1258 = vmatprep.subr.mxu0 0.0
        %1259 = vmatpush1.xpose.msra.mxu0 0.0
        %1260 = vmatprep.subr.mxu0 0.0
        %1261 = vmatpush1.xpose.msra.mxu0 0.0
        %1262 = vmatprep.subr.mxu0 0.0
        %1263 = vmatpush1.xpose.msra.mxu0 0.0
        %1264 = vmatprep.subr.mxu0 0.0
        %1265 = vmatpush1.xpose.msra.mxu0 0.0
        %1266 = vmatprep.subr.mxu0 0.0
        %1267 = vmatpush1.xpose.msra.mxu0 %v1234
        %1268 = vmatprep.subr.mxu0 0.0
        %1269 = vmatpush2.xpose.msra.mxu0 0.0
        %1270 = vmatprep.subr.mxu0 0.0
        %1271 = vmatpush2.xpose.msra.mxu0 0.0
        %1272 = vmatprep.subr.mxu0 0.0
        %1273 = vmatpush2.xpose.msra.mxu0 0.0
        %1274 = vmatprep.subr.mxu0 0.0
        %1275 = vmatpush2.xpose.msra.mxu0 0.0
        %1276 = vmatprep.subr.mxu0 0.0
        %1277 = vmatpush2.xpose.msra.mxu0 0.0
        %1278 = vmatprep.subr.mxu0 0.0
        %1279 = vmatpush2.xpose.msra.mxu0 0.0
        %1280 = vmatprep.subr.mxu0 0.0
        %1281 = vmatpush2.xpose.msra.mxu0 0.0
        %1282 = vmatprep.subr.mxu0 0.0
        %1283 = vmatpush2.xpose.msra.mxu0 0.0
        %1284 = vmatprep.subr.mxu0 0.0
        %1285 = vmatpush2.xpose.msra.mxu0 0.0
        %1286 = vmatprep.subr.mxu0 0.0
        %1287 = vmatpush2.xpose.msra.mxu0 0.0
        %1288 = vmatprep.subr.mxu0 0.0
        %1289 = vmatpush2.xpose.msra.mxu0 0.0
        %1290 = vmatprep.subr.mxu0 0.0
        %1291 = vmatpush2.xpose.msra.mxu0 0.0
        %1292 = vmatprep.subr.mxu0 0.0
        %1293 = vmatpush2.xpose.msra.mxu0 0.0
        %1294 = vmatprep.subr.mxu0 0.0
        %1295 = vmatpush2.xpose.msra.mxu0 0.0
        %1296 = vmatprep.subr.mxu0 0.0
        %1297 = vmatpush2.xpose.msra.mxu0 0.0
        %1298 = vmatprep.subr.mxu0 0.0
        %1299 = vmatpush2.xpose.msra.mxu0 0.0
        %1300 = vmatprep.mubr.f32.mxu0 0.0
        %1301 = vmatmul.mubr.f32.gmra.mxu0 %v1232
        %v1302 = vpop.f32.mrf.mxu0
        %v1303 = vadd.f32 0.0, %v1302
        %v1304 = vpop.f32.mrf.mxu0
        %1305 = vdwg.mxu0
        %v1306 = vld [vmem:[#allocation3] sm:$0xff]
        %v1307 = vsel %vm850, %v1303, -inf
        %1308 = vmax.xlane.f32.xlu0 %v1307
        %v1309 = vpop.xlane.xlu0 %1308
        %v1310 = vmax.f32 %v1306, %v1309
        %v1311 = vsub.f32 %v1306, %v1310
        %v1312 = vmul.f32 %v1311, 1.442695
        %v1313 = vpow.pop %v1312
        %1315 = vset.pattern.permute.xlu0 2
        %1316 = vperm.xlu0 %1315, %v1310
        %v1317 = vpop.permute.xlu0 %1316
        %v1319 = vsub.f32 %v1303, %v1317
        %v1320 = vmul.f32 %v1319, 1.442695
        %v1321 = vpow.pop %v1320
        %v1322 = vld [vmem:[#allocation4] sm:$0xff]
        %v1323 = vmul.f32 %v1313, %v1322
        %v1324 = vsel %vm850, %v1321, 0.0
        %1325 = vadd.xlane.f32.xlu0 %v1324
        %v1326 = vpop.xlane.xlu0 %1325
        %v1327 = vadd.f32 %v1323, %v1326
        %vm1328 = vcmask 23568
        %1329 = vst.msk [vmem:[#allocation4] sm:$0xff] %vm1328, %v1327
        %v1330 = vld [vmem:[#allocation5] sm:$0xff]
        %1332 = vset.pattern.permute.xlu0 2
        %1333 = vperm.xlu0 %1332, %v1313
        %v1334 = vpop.permute.xlu0 %1333
        %v1336 = vmul.f32 %v1334, %v1330
        %1337 = vrot.lane.b32.xlu0 %v846, 112
        %v1338 = vpop.permute.xlu0 %1337
        %v1341 = vsel %vm850, %v1321, 0
        %1343 = vmatprep.subr.mxu0 0.0
        %1344 = vmatpush1.msra.mxu0 0.0
        %1345 = vmatprep.subr.mxu0 0.0
        %1346 = vmatpush1.msra.mxu0 0.0
        %1347 = vmatprep.subr.mxu0 0.0
        %1348 = vmatpush1.msra.mxu0 0.0
        %1349 = vmatprep.subr.mxu0 0.0
        %1350 = vmatpush1.msra.mxu0 0.0
        %1351 = vmatprep.subr.mxu0 0.0
        %1352 = vmatpush1.msra.mxu0 0.0
        %1353 = vmatprep.subr.mxu0 0.0
        %1354 = vmatpush1.msra.mxu0 0.0
        %1355 = vmatprep.subr.mxu0 0.0
        %1356 = vmatpush1.msra.mxu0 0.0
        %1357 = vmatprep.subr.mxu0 0.0
        %1358 = vmatpush1.msra.mxu0 0.0
        %1359 = vmatprep.subr.mxu0 0.0
        %1360 = vmatpush1.msra.mxu0 0.0
        %1361 = vmatprep.subr.mxu0 0.0
        %1362 = vmatpush1.msra.mxu0 0.0
        %1363 = vmatprep.subr.mxu0 0.0
        %1364 = vmatpush1.msra.mxu0 0.0
        %1365 = vmatprep.subr.mxu0 0.0
        %1366 = vmatpush1.msra.mxu0 0.0
        %1367 = vmatprep.subr.mxu0 0.0
        %1368 = vmatpush1.msra.mxu0 0.0
        %1369 = vmatprep.subr.mxu0 0.0
        %1370 = vmatpush1.msra.mxu0 0.0
        %1371 = vmatprep.subr.mxu0 0.0
        %1372 = vmatpush1.msra.mxu0 0.0
        %1373 = vmatprep.subr.mxu0 0.0
        %1374 = vmatpush1.msra.mxu0 %v1338
        %1375 = vmatprep.subr.mxu0 0.0
        %1376 = vmatpush2.msra.mxu0 0.0
        %1377 = vmatprep.subr.mxu0 0.0
        %1378 = vmatpush2.msra.mxu0 0.0
        %1379 = vmatprep.subr.mxu0 0.0
        %1380 = vmatpush2.msra.mxu0 0.0
        %1381 = vmatprep.subr.mxu0 0.0
        %1382 = vmatpush2.msra.mxu0 0.0
        %1383 = vmatprep.subr.mxu0 0.0
        %1384 = vmatpush2.msra.mxu0 0.0
        %1385 = vmatprep.subr.mxu0 0.0
        %1386 = vmatpush2.msra.mxu0 0.0
        %1387 = vmatprep.subr.mxu0 0.0
        %1388 = vmatpush2.msra.mxu0 0.0
        %1389 = vmatprep.subr.mxu0 0.0
        %1390 = vmatpush2.msra.mxu0 0.0
        %1391 = vmatprep.subr.mxu0 0.0
        %1392 = vmatpush2.msra.mxu0 0.0
        %1393 = vmatprep.subr.mxu0 0.0
        %1394 = vmatpush2.msra.mxu0 0.0
        %1395 = vmatprep.subr.mxu0 0.0
        %1396 = vmatpush2.msra.mxu0 0.0
        %1397 = vmatprep.subr.mxu0 0.0
        %1398 = vmatpush2.msra.mxu0 0.0
        %1399 = vmatprep.subr.mxu0 0.0
        %1400 = vmatpush2.msra.mxu0 0.0
        %1401 = vmatprep.subr.mxu0 0.0
        %1402 = vmatpush2.msra.mxu0 0.0
        %1403 = vmatprep.subr.mxu0 0.0
        %1404 = vmatpush2.msra.mxu0 0.0
        %1405 = vmatprep.subr.mxu0 0.0
        %1406 = vmatpush2.msra.mxu0 0.0
        %1407 = vmatprep.mubr.f32.mxu0 0.0
        %1408 = vmatmul.mubr.f32.gmra.mxu0 %v1341
        %v1409 = vpop.f32.mrf.mxu0
        %v1410 = vadd.f32 0.0, %v1409
        %v1411 = vpop.f32.mrf.mxu0
        %1412 = vdwg.mxu0
        %1414 = vrot.lane.b32.xlu0 %v1410, 16
        %v1415 = vpop.permute.xlu0 %1414
        %v1417 = vadd.f32 %v1336, %v1415
        %vm1418 = vcmask 195712
        %1419 = vst.msk [vmem:[#allocation5] sm:$0xff] %vm1418, %v1417
        %1420 = vst.msk [vmem:[#allocation3] sm:$0xff] %vm1328, %v1310
        %1421 = vrot.lane.b32.xlu0 %v849, 104
        %v1422 = vpop.permute.xlu0 %1421
        %1423 = vrot.lane.b32.xlu0 %v763, 104
        %v1424 = vpop.permute.xlu0 %1423
        %v1425 = vsel %vm850, %v1422, 0
        %v1427 = vsel %vm850, %v1424, 0
        %1429 = vmatprep.subr.mxu0 0.0
        %1430 = vmatpush1.xpose.msra.mxu0 0.0
        %1431 = vmatprep.subr.mxu0 0.0
        %1432 = vmatpush1.xpose.msra.mxu0 0.0
        %1433 = vmatprep.subr.mxu0 0.0
        %1434 = vmatpush1.xpose.msra.mxu0 0.0
        %1435 = vmatprep.subr.mxu0 0.0
        %1436 = vmatpush1.xpose.msra.mxu0 0.0
        %1437 = vmatprep.subr.mxu0 0.0
        %1438 = vmatpush1.xpose.msra.mxu0 0.0
        %1439 = vmatprep.subr.mxu0 0.0
        %1440 = vmatpush1.xpose.msra.mxu0 0.0
        %1441 = vmatprep.subr.mxu0 0.0
        %1442 = vmatpush1.xpose.msra.mxu0 0.0
        %1443 = vmatprep.subr.mxu0 0.0
        %1444 = vmatpush1.xpose.msra.mxu0 0.0
        %1445 = vmatprep.subr.mxu0 0.0
        %1446 = vmatpush1.xpose.msra.mxu0 0.0
        %1447 = vmatprep.subr.mxu0 0.0
        %1448 = vmatpush1.xpose.msra.mxu0 0.0
        %1449 = vmatprep.subr.mxu0 0.0
        %1450 = vmatpush1.xpose.msra.mxu0 0.0
        %1451 = vmatprep.subr.mxu0 0.0
        %1452 = vmatpush1.xpose.msra.mxu0 0.0
        %1453 = vmatprep.subr.mxu0 0.0
        %1454 = vmatpush1.xpose.msra.mxu0 0.0
        %1455 = vmatprep.subr.mxu0 0.0
        %1456 = vmatpush1.xpose.msra.mxu0 0.0
        %1457 = vmatprep.subr.mxu0 0.0
        %1458 = vmatpush1.xpose.msra.mxu0 0.0
        %1459 = vmatprep.subr.mxu0 0.0
        %1460 = vmatpush1.xpose.msra.mxu0 %v1427
        %1461 = vmatprep.subr.mxu0 0.0
        %1462 = vmatpush2.xpose.msra.mxu0 0.0
        %1463 = vmatprep.subr.mxu0 0.0
        %1464 = vmatpush2.xpose.msra.mxu0 0.0
        %1465 = vmatprep.subr.mxu0 0.0
        %1466 = vmatpush2.xpose.msra.mxu0 0.0
        %1467 = vmatprep.subr.mxu0 0.0
        %1468 = vmatpush2.xpose.msra.mxu0 0.0
        %1469 = vmatprep.subr.mxu0 0.0
        %1470 = vmatpush2.xpose.msra.mxu0 0.0
        %1471 = vmatprep.subr.mxu0 0.0
        %1472 = vmatpush2.xpose.msra.mxu0 0.0
        %1473 = vmatprep.subr.mxu0 0.0
        %1474 = vmatpush2.xpose.msra.mxu0 0.0
        %1475 = vmatprep.subr.mxu0 0.0
        %1476 = vmatpush2.xpose.msra.mxu0 0.0
        %1477 = vmatprep.subr.mxu0 0.0
        %1478 = vmatpush2.xpose.msra.mxu0 0.0
        %1479 = vmatprep.subr.mxu0 0.0
        %1480 = vmatpush2.xpose.msra.mxu0 0.0
        %1481 = vmatprep.subr.mxu0 0.0
        %1482 = vmatpush2.xpose.msra.mxu0 0.0
        %1483 = vmatprep.subr.mxu0 0.0
        %1484 = vmatpush2.xpose.msra.mxu0 0.0
        %1485 = vmatprep.subr.mxu0 0.0
        %1486 = vmatpush2.xpose.msra.mxu0 0.0
        %1487 = vmatprep.subr.mxu0 0.0
        %1488 = vmatpush2.xpose.msra.mxu0 0.0
        %1489 = vmatprep.subr.mxu0 0.0
        %1490 = vmatpush2.xpose.msra.mxu0 0.0
        %1491 = vmatprep.subr.mxu0 0.0
        %1492 = vmatpush2.xpose.msra.mxu0 0.0
        %1493 = vmatprep.mubr.f32.mxu0 0.0
        %1494 = vmatmul.mubr.f32.gmra.mxu0 %v1425
        %v1495 = vpop.f32.mrf.mxu0
        %v1496 = vadd.f32 0.0, %v1495
        %v1497 = vpop.f32.mrf.mxu0
        %1498 = vdwg.mxu0
        %v1499 = vld [vmem:[#allocation3] sm:$0xff]
        %v1500 = vsel %vm850, %v1496, -inf
        %1501 = vmax.xlane.f32.xlu0 %v1500
        %v1502 = vpop.xlane.xlu0 %1501
        %v1503 = vmax.f32 %v1499, %v1502
        %v1504 = vsub.f32 %v1499, %v1503
        %v1505 = vmul.f32 %v1504, 1.442695
        %v1506 = vpow.pop %v1505
        %1508 = vset.pattern.permute.xlu0 3
        %1509 = vperm.xlu0 %1508, %v1503
        %v1510 = vpop.permute.xlu0 %1509
        %v1512 = vsub.f32 %v1496, %v1510
        %v1513 = vmul.f32 %v1512, 1.442695
        %v1514 = vpow.pop %v1513
        %v1515 = vld [vmem:[#allocation4] sm:$0xff]
        %v1516 = vmul.f32 %v1506, %v1515
        %v1517 = vsel %vm850, %v1514, 0.0
        %1518 = vadd.xlane.f32.xlu0 %v1517
        %v1519 = vpop.xlane.xlu0 %1518
        %v1520 = vadd.f32 %v1516, %v1519
        %vm1521 = vcmask 31768
        %1522 = vst.msk [vmem:[#allocation4] sm:$0xff] %vm1521, %v1520
        %v1523 = vld [vmem:[#allocation5] sm:$0xff]
        %1525 = vset.pattern.permute.xlu0 3
        %1526 = vperm.xlu0 %1525, %v1506
        %v1527 = vpop.permute.xlu0 %1526
        %v1529 = vmul.f32 %v1527, %v1523
        %1530 = vrot.lane.b32.xlu0 %v846, 104
        %v1531 = vpop.permute.xlu0 %1530
        %v1534 = vsel %vm850, %v1514, 0
        %1536 = vmatprep.subr.mxu0 0.0
        %1537 = vmatpush1.msra.mxu0 0.0
        %1538 = vmatprep.subr.mxu0 0.0
        %1539 = vmatpush1.msra.mxu0 0.0
        %1540 = vmatprep.subr.mxu0 0.0
        %1541 = vmatpush1.msra.mxu0 0.0
        %1542 = vmatprep.subr.mxu0 0.0
        %1543 = vmatpush1.msra.mxu0 0.0
        %1544 = vmatprep.subr.mxu0 0.0
        %1545 = vmatpush1.msra.mxu0 0.0
        %1546 = vmatprep.subr.mxu0 0.0
        %1547 = vmatpush1.msra.mxu0 0.0
        %1548 = vmatprep.subr.mxu0 0.0
        %1549 = vmatpush1.msra.mxu0 0.0
        %1550 = vmatprep.subr.mxu0 0.0
        %1551 = vmatpush1.msra.mxu0 0.0
        %1552 = vmatprep.subr.mxu0 0.0
        %1553 = vmatpush1.msra.mxu0 0.0
        %1554 = vmatprep.subr.mxu0 0.0
        %1555 = vmatpush1.msra.mxu0 0.0
        %1556 = vmatprep.subr.mxu0 0.0
        %1557 = vmatpush1.msra.mxu0 0.0
        %1558 = vmatprep.subr.mxu0 0.0
        %1559 = vmatpush1.msra.mxu0 0.0
        %1560 = vmatprep.subr.mxu0 0.0
        %1561 = vmatpush1.msra.mxu0 0.0
        %1562 = vmatprep.subr.mxu0 0.0
        %1563 = vmatpush1.msra.mxu0 0.0
        %1564 = vmatprep.subr.mxu0 0.0
        %1565 = vmatpush1.msra.mxu0 0.0
        %1566 = vmatprep.subr.mxu0 0.0
        %1567 = vmatpush1.msra.mxu0 %v1531
        %1568 = vmatprep.subr.mxu0 0.0
        %1569 = vmatpush2.msra.mxu0 0.0
        %1570 = vmatprep.subr.mxu0 0.0
        %1571 = vmatpush2.msra.mxu0 0.0
        %1572 = vmatprep.subr.mxu0 0.0
        %1573 = vmatpush2.msra.mxu0 0.0
        %1574 = vmatprep.subr.mxu0 0.0
        %1575 = vmatpush2.msra.mxu0 0.0
        %1576 = vmatprep.subr.mxu0 0.0
        %1577 = vmatpush2.msra.mxu0 0.0
        %1578 = vmatprep.subr.mxu0 0.0
        %1579 = vmatpush2.msra.mxu0 0.0
        %1580 = vmatprep.subr.mxu0 0.0
        %1581 = vmatpush2.msra.mxu0 0.0
        %1582 = vmatprep.subr.mxu0 0.0
        %1583 = vmatpush2.msra.mxu0 0.0
        %1584 = vmatprep.subr.mxu0 0.0
        %1585 = vmatpush2.msra.mxu0 0.0
        %1586 = vmatprep.subr.mxu0 0.0
        %1587 = vmatpush2.msra.mxu0 0.0
        %1588 = vmatprep.subr.mxu0 0.0
        %1589 = vmatpush2.msra.mxu0 0.0
        %1590 = vmatprep.subr.mxu0 0.0
        %1591 = vmatpush2.msra.mxu0 0.0
        %1592 = vmatprep.subr.mxu0 0.0
        %1593 = vmatpush2.msra.mxu0 0.0
        %1594 = vmatprep.subr.mxu0 0.0
        %1595 = vmatpush2.msra.mxu0 0.0
        %1596 = vmatprep.subr.mxu0 0.0
        %1597 = vmatpush2.msra.mxu0 0.0
        %1598 = vmatprep.subr.mxu0 0.0
        %1599 = vmatpush2.msra.mxu0 0.0
        %1600 = vmatprep.mubr.f32.mxu0 0.0
        %1601 = vmatmul.mubr.f32.gmra.mxu0 %v1534
        %v1602 = vpop.f32.mrf.mxu0
        %v1603 = vadd.f32 0.0, %v1602
        %v1604 = vpop.f32.mrf.mxu0
        %1605 = vdwg.mxu0
        %1607 = vrot.lane.b32.xlu0 %v1603, 24
        %v1608 = vpop.permute.xlu0 %1607
        %v1610 = vadd.f32 %v1529, %v1608
        %vm1611 = vcmask 261312
        %1612 = vst.msk [vmem:[#allocation5] sm:$0xff] %vm1611, %v1610
        %1613 = vst.msk [vmem:[#allocation3] sm:$0xff] %vm1521, %v1503
        // Predicated region
        $region101: #{tpu_custom_call.1} parent=67 // pred_check
          %p1614 = pneg %p588
        $region102: #{tpu_custom_call.1} parent=67 // pred_check_branch
          %1616 = sbr.rel (%p1614) target = $region104
        $region103: #{tpu_custom_call.1} parent=67 // pred_region
          %v1617 = vld [vmem:[#allocation4] sm:$0xff]
          %v1618 = vrcp.pop %v1617
          %v1619 = vld [vmem:[%s11] sm:$0xf]
          %vm1620 = vcmask 31744
          %v1622 = vsel %vm1620, %v1618, 0
          %vm1624 = vcmask 1043456
          %v1626 = vsel %vm1624, %v1619, 0
          %1628 = vmatprep.subr.mxu0 0.0
          %1629 = vmatpush1.msra.mxu0 0.0
          %1630 = vmatprep.subr.mxu0 0.0
          %1631 = vmatpush1.msra.mxu0 0.0
          %1632 = vmatprep.subr.mxu0 0.0
          %1633 = vmatpush1.msra.mxu0 0.0
          %1634 = vmatprep.subr.mxu0 0.0
          %1635 = vmatpush1.msra.mxu0 0.0
          %1636 = vmatprep.subr.mxu0 0.0
          %1637 = vmatpush1.msra.mxu0 0.0
          %1638 = vmatprep.subr.mxu0 0.0
          %1639 = vmatpush1.msra.mxu0 0.0
          %1640 = vmatprep.subr.mxu0 0.0
          %1641 = vmatpush1.msra.mxu0 0.0
          %1642 = vmatprep.subr.mxu0 0.0
          %1643 = vmatpush1.msra.mxu0 0.0
          %1644 = vmatprep.subr.mxu0 0.0
          %1645 = vmatpush1.msra.mxu0 0.0
          %1646 = vmatprep.subr.mxu0 0.0
          %1647 = vmatpush1.msra.mxu0 0.0
          %1648 = vmatprep.subr.mxu0 0.0
          %1649 = vmatpush1.msra.mxu0 0.0
          %1650 = vmatprep.subr.mxu0 0.0
          %1651 = vmatpush1.msra.mxu0 0.0
          %1652 = vmatprep.subr.mxu0 0.0
          %1653 = vmatpush1.msra.mxu0 0.0
          %1654 = vmatprep.subr.mxu0 0.0
          %1655 = vmatpush1.msra.mxu0 0.0
          %1656 = vmatprep.subr.mxu0 0.0
          %1657 = vmatpush1.msra.mxu0 0.0
          %1658 = vmatprep.subr.mxu0 0.0
          %1659 = vmatpush1.msra.mxu0 %v1626
          %1660 = vmatprep.subr.mxu0 0.0
          %1661 = vmatpush2.msra.mxu0 0.0
          %1662 = vmatprep.subr.mxu0 0.0
          %1663 = vmatpush2.msra.mxu0 0.0
          %1664 = vmatprep.subr.mxu0 0.0
          %1665 = vmatpush2.msra.mxu0 0.0
          %1666 = vmatprep.subr.mxu0 0.0
          %1667 = vmatpush2.msra.mxu0 0.0
          %1668 = vmatprep.subr.mxu0 0.0
          %1669 = vmatpush2.msra.mxu0 0.0
          %1670 = vmatprep.subr.mxu0 0.0
          %1671 = vmatpush2.msra.mxu0 0.0
          %1672 = vmatprep.subr.mxu0 0.0
          %1673 = vmatpush2.msra.mxu0 0.0
          %1674 = vmatprep.subr.mxu0 0.0
          %1675 = vmatpush2.msra.mxu0 0.0
          %1676 = vmatprep.subr.mxu0 0.0
          %1677 = vmatpush2.msra.mxu0 0.0
          %1678 = vmatprep.subr.mxu0 0.0
          %1679 = vmatpush2.msra.mxu0 0.0
          %1680 = vmatprep.subr.mxu0 0.0
          %1681 = vmatpush2.msra.mxu0 0.0
          %1682 = vmatprep.subr.mxu0 0.0
          %1683 = vmatpush2.msra.mxu0 0.0
          %1684 = vmatprep.subr.mxu0 0.0
          %1685 = vmatpush2.msra.mxu0 0.0
          %1686 = vmatprep.subr.mxu0 0.0
          %1687 = vmatpush2.msra.mxu0 0.0
          %1688 = vmatprep.subr.mxu0 0.0
          %1689 = vmatpush2.msra.mxu0 0.0
          %1690 = vmatprep.subr.mxu0 0.0
          %1691 = vmatpush2.msra.mxu0 0.0
          %1692 = vmatprep.mubr.f32.mxu0 0.0
          %1693 = vmatmul.mubr.f32.gmra.mxu0 %v1622
          %v1694 = vpop.f32.mrf.mxu0
          %v1695 = vadd.f32 0.0, %v1694
          %v1696 = vpop.f32.mrf.mxu0
          %1697 = vdwg.mxu0
          %v1698 = vld [vmem:[#allocation5] sm:$0xff]
          %v1699 = vmul.f32 %v1698, %v1695
          %v1700 = vld [vmem:[#allocation17] sm:$0xff]
          %v1701 = vld [vmem:[#allocation17 + $0x8] sm:$0xff]
          %v1702 = vld [vmem:[#allocation17 + $0x10] sm:$0xff]
          %v1703 = vld [vmem:[#allocation17 + $0x18] sm:$0xff]
          %v1704 = vld [vmem:[%s10] sm:$0x1]
          %v1706 = vlaneseq
          %v1707 = vshrl.u32 %v1706, 7
          %v1708 = vsub.s32 0, %v1707
          %v1709 = vrot.slane %v1704, %v1708
          %vm1711 = vcmask 261120
          %v1713 = vsel %vm1711, %v1699, 0
          %1715 = vmatprep.subr.mxu0 0.0
          %1716 = vmatpush1.msra.mxu0 0.0
          %1717 = vmatprep.subr.mxu0 0.0
          %1718 = vmatpush1.msra.mxu0 0.0
          %1719 = vmatprep.subr.mxu0 0.0
          %1720 = vmatpush1.msra.mxu0 0.0
          %1721 = vmatprep.subr.mxu0 0.0
          %1722 = vmatpush1.msra.mxu0 0.0
          %1723 = vmatprep.subr.mxu0 0.0
          %1724 = vmatpush1.msra.mxu0 0.0
          %1725 = vmatprep.subr.mxu0 0.0
          %1726 = vmatpush1.msra.mxu0 0.0
          %1727 = vmatprep.subr.mxu0 0.0
          %1728 = vmatpush1.msra.mxu0 0.0
          %1729 = vmatprep.subr.mxu0 0.0
          %1730 = vmatpush1.msra.mxu0 0.0
          %1731 = vmatprep.subr.mxu0 0.0
          %1732 = vmatpush1.msra.mxu0 0.0
          %1733 = vmatprep.subr.mxu0 0.0
          %1734 = vmatpush1.msra.mxu0 0.0
          %1735 = vmatprep.subr.mxu0 0.0
          %1736 = vmatpush1.msra.mxu0 0.0
          %1737 = vmatprep.subr.mxu0 0.0
          %1738 = vmatpush1.msra.mxu0 0.0
          %1739 = vmatprep.subr.mxu0 0.0
          %1740 = vmatpush1.msra.mxu0 %v1703
          %1741 = vmatprep.subr.mxu0 0.0
          %1742 = vmatpush1.msra.mxu0 %v1702
          %1743 = vmatprep.subr.mxu0 0.0
          %1744 = vmatpush1.msra.mxu0 %v1701
          %1745 = vmatprep.subr.mxu0 0.0
          %1746 = vmatpush1.msra.mxu0 %v1700
          %1747 = vmatprep.subr.mxu0 0.0
          %1748 = vmatpush2.msra.mxu0 0.0
          %1749 = vmatprep.subr.mxu0 0.0
          %1750 = vmatpush2.msra.mxu0 0.0
          %1751 = vmatprep.subr.mxu0 0.0
          %1752 = vmatpush2.msra.mxu0 0.0
          %1753 = vmatprep.subr.mxu0 0.0
          %1754 = vmatpush2.msra.mxu0 0.0
          %1755 = vmatprep.subr.mxu0 0.0
          %1756 = vmatpush2.msra.mxu0 0.0
          %1757 = vmatprep.subr.mxu0 0.0
          %1758 = vmatpush2.msra.mxu0 0.0
          %1759 = vmatprep.subr.mxu0 0.0
          %1760 = vmatpush2.msra.mxu0 0.0
          %1761 = vmatprep.subr.mxu0 0.0
          %1762 = vmatpush2.msra.mxu0 0.0
          %1763 = vmatprep.subr.mxu0 0.0
          %1764 = vmatpush2.msra.mxu0 0.0
          %1765 = vmatprep.subr.mxu0 0.0
          %1766 = vmatpush2.msra.mxu0 0.0
          %1767 = vmatprep.subr.mxu0 0.0
          %1768 = vmatpush2.msra.mxu0 0.0
          %1769 = vmatprep.subr.mxu0 0.0
          %1770 = vmatpush2.msra.mxu0 0.0
          %1771 = vmatprep.subr.mxu0 0.0
          %1772 = vmatpush2.msra.mxu0 0.0
          %1773 = vmatprep.subr.mxu0 0.0
          %1774 = vmatpush2.msra.mxu0 0.0
          %1775 = vmatprep.subr.mxu0 0.0
          %1776 = vmatpush2.msra.mxu0 0.0
          %1777 = vmatprep.subr.mxu0 0.0
          %1778 = vmatpush2.msra.mxu0 0.0
          %1779 = vmatprep.mubr.f32.mxu0 0.0
          %1780 = vmatmul.mubr.f32.gmra.mxu0 %v1713
          %v1781 = vpop.f32.mrf.mxu0
          %v1782 = vadd.f32 %v1709, %v1781
          %v1783 = vpop.f32.mrf.mxu0
          %1784 = vdwg.mxu0
          %1785 = vst.msk [vmem:[%s587] sm:$0xff] %vm1711, %v1782
        $region104: #{tpu_custom_call.1} parent=67 // pred_fallthru
          _
        %s1786 = sand.u32 %s336, 1
        %s1787 = scalar_lea.sflag [#allocation8], %s1786
        %s1788 = sand.u32 %s336, 1
        %s1789 = smul.addr %s1788, 8
        %s1790 = scalar_lea.vmem [#allocation18], %s1789
        // Predicated region
        $region105: #{tpu_custom_call.1} parent=67 // pred_check
          %p1791 = pneg %p346
        $region106: #{tpu_custom_call.1} parent=67 // pred_check_branch
          %1793 = sbr.rel (%p1791) target = $region108
        $region107: #{tpu_custom_call.1} parent=67 // pred_region
          %s1795 = ssub.s32 128, 128
          %1796 = vsyncadd %s1787, %s1795
          %s1797 = sadd.s32 %s40, %s39
          %s1798 = smul.addr %s1797, 128
          %s1799 = scalar_lea.hbm %s12, %s1798
          %s1801 = sshll.u32 %s1790, 4
          %s1802 = int_to_ptr.vmem [resolvable:$true] %s1801
          %1804 = dma.vmem_to_hbm [thread:$0]  %s1802, 128, %s1799, %s1787
        $region108: #{tpu_custom_call.1} parent=67 // pred_fallthru
          _
      $region68: #{tpu_custom_call.1} parent=5 // pred_fallthru
        _
      %p1805 = scmp.le.s32.totalorder 2, %s29
      // Predicated region
      $region109: #{tpu_custom_call.1} parent=5 // pred_check
        %p1806 = pneg %p1805
      $region110: #{tpu_custom_call.1} parent=5 // pred_check_branch
        %1808 = sbr.rel (%p1806) target = $region112
      $region111: #{tpu_custom_call.1} parent=5 // pred_region
        %s1809 = ssub.s32 %s29, 2
        // Predicated region
        $region113: #{tpu_custom_call.1} parent=111 // pred_check
          %p1810 = pneg %p352
        $region114: #{tpu_custom_call.1} parent=111 // pred_check_branch
          %1812 = sbr.rel (%p1810) target = $region116
        $region115: #{tpu_custom_call.1} parent=111 // pred_region
          %s1813 = sand.u32 %s337, 1
          %s1814 = scalar_lea.sflag [#allocation8], %s1813
          %s1815 = sand.u32 %s337, 1
          %s1816 = smul.addr %s1815, 8
          %s1817 = scalar_lea.vmem [#allocation18], %s1816
          %1818 = dma.done %s1814, 128
        $region116: #{tpu_custom_call.1} parent=111 // pred_fallthru
          _
      $region112: #{tpu_custom_call.1} parent=5 // pred_fallthru
        _
    $region6: #{tpu_custom_call.1} parent=1 // loop_footer
      %s33 = sadd.s32 1, %s29
    $region7: #{tpu_custom_call.1} parent=1 // loop_footer_branch
      %28 = sbr.rel target = $region3
    $region8: #{tpu_custom_call.1} parent=1 // loop_exit
      _
    %1819 = vsyncpa [#allocation7], 1
    %s1820 = scalar_lea.sflag [#allocation7], 1
    %1821 = vsyncpa %s1820, 1
    %1822 = vsyncpa [#allocation10], 1
    %s1823 = scalar_lea.sflag [#allocation10], 1
    %1824 = vsyncpa %s1823, 1
    %1825 = vsyncpa [#allocation13], 1
    %1826 = vsyncpa [#allocation16], 1
    %1827 = vsyncpa [#allocation8], 1
    %s1828 = scalar_lea.sflag [#allocation8], 1
    %1829 = vsyncpa %s1828, 1

</llo_original>
